<compile_context>
chip_gen: v7x
topology: tpu7x:2x2x1
jax: 0.10.0
libtpu: 0.0.40
codegen_flags: <defaults>
</compile_context>

<pallas_src>
import jax
import jax.numpy as jnp
from jax.experimental import pallas as pl
from jax.experimental.pallas import tpu as pltpu

HIDDEN = 32
INPUT_SIZE = 2
NUM_LAYERS = 3
NUM_ACTIONS = 4          # env.action_space.n
I_PAD = 32               # input features padded 2 -> 32 (zero rows) so layer 0
                         # uses the same fused K=72 dot as layers 1/2
ONES_ROWS = 8            # constant all-ones block used to fold biases into dots
A_PAD = 8                # fc output rows padded 4 -> 8 (sublane multiple)

# ---- packed weight slab layout (transposed weights, lane width 72) ------------
SLAB_COLS = 2 * HIDDEN + ONES_ROWS          # 72: [W_in^T | W_hh^T | bias | 0...]
OFF_W0 = 0                                  # (32, 72) layer 0
OFF_W1 = OFF_W0 + HIDDEN                    # (32, 72) layer 1
OFF_W2 = OFF_W1 + HIDDEN                    # (32, 72) layer 2
OFF_FC = OFF_W2 + HIDDEN                    # ( 8, 72) fc: [Wfc^T | bfc | 0...]
SLAB_ROWS = OFF_FC + A_PAD                  # 104
K_FC = HIDDEN + ONES_ROWS                   # 40


def rnn_policy_kernel(x_ref, w_ref, out_ref):
    """One batch tile of the full RNNPolicy forward (batch on the lane axis).

    x_ref   : (T, I_PAD, TILE_B)   time-major, feature rows 2..31 are zero
    w_ref   : (SLAB_ROWS, SLAB_COLS) packed transposed weights + biases
    out_ref : (A_PAD, TILE_B)      logits; only first NUM_ACTIONS rows meaningful
    """
    T = x_ref.shape[0]
    TB = x_ref.shape[2]
    H = HIDDEN

    # Hoisted, static weight-slab slices (loaded once per kernel invocation).
    w0 = w_ref[OFF_W0:OFF_W0 + H, :]              # (32, 72)
    w1 = w_ref[OFF_W1:OFF_W1 + H, :]              # (32, 72)
    w2 = w_ref[OFF_W2:OFF_W2 + H, :]              # (32, 72)
    wfc = w_ref[OFF_FC:OFF_FC + A_PAD, 0:K_FC]    # (8, 40)

    # Constant ones block: column 2*H of each weight slab holds the bias, so the
    # dot against these rows adds the bias -> no per-step VPU bias add, no
    # hoisted bias broadcasts living in vregs across the unroll.
    ones = jnp.ones((ONES_ROWS, TB), jnp.float32)

    h0 = jnp.zeros((H, TB), jnp.float32)
    h1 = jnp.zeros((H, TB), jnp.float32)
    h2 = jnp.zeros((H, TB), jnp.float32)

    # Skewed (wavefront) schedule: step s updates h0 at time s, h1 at time s-1,
    # h2 at time s-2.  Reading all previous values first makes the (up to) three
    # dots in a step mutually independent -> dependent-matmul depth is T+2.
    # T is small and static -> full unroll (LLO scheduler sees the whole chain).
    for s in range(T + 2):
        h0_prev, h1_prev, h2_prev = h0, h1, h2
        if s < T:
            s0 = jnp.concatenate([x_ref[s], h0_prev, ones], axis=0)      # (72, TB)
            h0 = jnp.maximum(
                jnp.dot(w0, s0, preferred_element_type=jnp.float32), 0.0)
        if 1 <= s <= T:
            s1 = jnp.concatenate([h0_prev, h1_prev, ones], axis=0)       # (72, TB)
            h1 = jnp.maximum(
                jnp.dot(w1, s1, preferred_element_type=jnp.float32), 0.0)
        if 2 <= s <= T + 1:
            s2 = jnp.concatenate([h1_prev, h2_prev, ones], axis=0)       # (72, TB)
            h2 = jnp.maximum(
                jnp.dot(w2, s2, preferred_element_type=jnp.float32), 0.0)

    # fc head on the last timestep's top-layer state; bias folded via ones rows.
    sfc = jnp.concatenate([h2, ones], axis=0)                            # (40, TB)
    out_ref[...] = jnp.dot(wfc, sfc, preferred_element_type=jnp.float32)


def init_params(key, hidden=HIDDEN, input_size=INPUT_SIZE,
                num_layers=NUM_LAYERS, num_actions=NUM_ACTIONS):
    """Deterministic PyTorch-style uniform(-1/sqrt(H), 1/sqrt(H)) init."""
    keys = jax.random.split(key, 4 * num_layers + 2)
    bound = 1.0 / jnp.sqrt(jnp.float32(hidden))

    def u(k, shape):
        return jax.random.uniform(k, shape, jnp.float32, -bound, bound)

    ki = iter(keys)
    wih0 = u(next(ki), (input_size, hidden))                     # layer 0, (in, out)
    wih12 = jnp.stack([u(next(ki), (hidden, hidden))
                       for _ in range(num_layers - 1)])          # layers 1..2
    whh = jnp.stack([u(next(ki), (hidden, hidden))
                     for _ in range(num_layers)])
    b_ih = jnp.stack([u(next(ki), (1, hidden)) for _ in range(num_layers)])
    bkeys = jax.random.split(keys[-2], num_layers)
    b_hh = jnp.stack([u(bkeys[l], (1, hidden)) for l in range(num_layers)])
    b = b_ih + b_hh                                              # combined bias

    fckeys = jax.random.split(keys[-1], 2)
    wfc = jax.random.uniform(fckeys[0], (hidden, num_actions), jnp.float32,
                             -bound, bound)
    bfc = jax.random.uniform(fckeys[1], (1, num_actions), jnp.float32,
                             -bound, bound)
    return wih0, wih12, whh, b, wfc, bfc


def pack_params(params):
    """Pack all (transposed) weights and biases into one (104, 72) f32 slab.

    Each layer block (32, 72): cols [0:32] = W_in^T, [32:64] = W_hh^T,
    col 64 = combined bias (picked up by the all-ones rows), cols 65..71 = 0.
    FC block (8, 72): cols [0:32] = Wfc^T, col 32 = bfc, rest 0.
    """
    wih0, wih12, whh, b, wfc, bfc = params
    H = HIDDEN

    def layer_block(wih_t, whh_t, bias_col):
        blk = jnp.zeros((H, SLAB_COLS), jnp.float32)
        blk = blk.at[:, 0:H].set(wih_t)
        blk = blk.at[:, H:2 * H].set(whh_t)
        blk = blk.at[:, 2 * H:2 * H + 1].set(bias_col)
        return blk

    wih0_t = jnp.zeros((H, H), jnp.float32).at[:, :INPUT_SIZE].set(wih0.T)
    blocks = [
        layer_block(wih0_t, whh[0].T, b[0].reshape(H, 1)),
        layer_block(wih12[0].T, whh[1].T, b[1].reshape(H, 1)),
        layer_block(wih12[1].T, whh[2].T, b[2].reshape(H, 1)),
    ]
    fc_blk = jnp.zeros((A_PAD, SLAB_COLS), jnp.float32)
    fc_blk = fc_blk.at[:NUM_ACTIONS, 0:H].set(wfc.T)
    fc_blk = fc_blk.at[:NUM_ACTIONS, H:H + 1].set(bfc.reshape(NUM_ACTIONS, 1))

    slab = jnp.concatenate(blocks + [fc_blk], axis=0)
    assert slab.shape == (SLAB_ROWS, SLAB_COLS)
    return slab


def _round_up(n, m):
    return ((n + m - 1) // m) * m


def rnn_policy_forward(seq, params):
    """seq: (B, 2, T) float32, matching the PyTorch module's expected input."""
    seq = jnp.asarray(seq, jnp.float32)
    B, _, T = seq.shape

    # Batch on lanes: pad to a multiple of 128 so every store is lane-dense.
    # Cap the tile at 256: single tile (one serial recurrence chain) for small
    # and medium batches (best on single-TC v5e/v6e); >=2 tiles for big batches
    # so the "parallel" grid axis can shard across v7x's two TensorCores.
    b_req = _round_up(max(B, 1), 128)
    tile_b = min(b_req, 256)
    b_pad = _round_up(b_req, tile_b)

    # Time-major, batch-on-lanes layout: (T, I_PAD, b_pad).
    x = jnp.transpose(seq, (2, 1, 0))                            # (T, 2, B)
    x = jnp.pad(x, ((0, 0), (0, I_PAD - INPUT_SIZE), (0, b_pad - B)))

    slab = pack_params(params)                                   # single weight DMA

    out = pl.pallas_call(
        rnn_policy_kernel,
        out_shape=jax.ShapeDtypeStruct((A_PAD, b_pad), jnp.float32),
        grid_spec=pltpu.PrefetchScalarGridSpec(
            num_scalar_prefetch=0,
            grid=(b_pad // tile_b,),                             # batch tiles
            in_specs=[
                pl.BlockSpec((T, I_PAD, tile_b), lambda b: (0, 0, b)),
                pl.BlockSpec((SLAB_ROWS, SLAB_COLS), lambda b: (0, 0)),
            ],
            out_specs=pl.BlockSpec((A_PAD, tile_b), lambda b: (0, b)),
        ),
        compiler_params=pltpu.CompilerParams(
            dimension_semantics=("parallel",)),                  # v7x: 2 TCs
    )(x, slab)

    return out[:NUM_ACTIONS, :B].T                               # (B, NUM_ACTIONS)


def rnn_policy_reference(seq, params):
    """Pure-JAX reference reproducing PyTorch nn.RNN(relu) + Linear semantics."""
    x = jnp.transpose(jnp.asarray(seq, jnp.float32), (0, 2, 1))  # (B, T, I)
    wih0, wih12, whh, b, wfc, bfc = params
    B, T, _ = x.shape
    H = whh.shape[-1]
    h = [jnp.zeros((B, H), jnp.float32) for _ in range(NUM_LAYERS)]
    for t in range(T):
        inp = x[:, t, :]
        h[0] = jax.nn.relu(inp @ wih0 + h[0] @ whh[0] + b[0])
        h[1] = jax.nn.relu(h[0] @ wih12[0] + h[1] @ whh[1] + b[1])
        h[2] = jax.nn.relu(h[1] @ wih12[1] + h[2] @ whh[2] + b[2])
    return h[2] @ wfc + bfc


if __name__ == "__main__":
    key = jax.random.PRNGKey(0)
    pkey, xkey, xkey2 = jax.random.split(key, 3)

    params = init_params(pkey)

    # Case 1: module-sized input (batch=2, features=2, seq len=8).
    B, T = 2, 8
    seq = jax.random.normal(xkey, (B, INPUT_SIZE, T), jnp.float32)   # (B, 2, T)
    out = jax.block_until_ready(rnn_policy_forward(seq, params))
    ref = rnn_policy_reference(seq, params)
    assert out.shape == (B, NUM_ACTIONS)
    assert jnp.allclose(out, ref, atol=1e-5, rtol=1e-5)

    # Case 2: exercises batch padding and a different sequence length.
    B2, T2 = 3, 5
    seq2 = jax.random.normal(xkey2, (B2, INPUT_SIZE, T2), jnp.float32)
    out2 = jax.block_until_ready(rnn_policy_forward(seq2, params))
    ref2 = rnn_policy_reference(seq2, params)
    assert out2.shape == (B2, NUM_ACTIONS)
    assert jnp.allclose(out2, ref2, atol=1e-5, rtol=1e-5)

    print("KERNEL_OK")
</pallas_src>

<mosaic_0001>
module attributes {stable_mosaic.version = 11 : i64} {
  func.func @rnn_policy_kernel(%arg0: i32, %arg1: memref<8x32x128xf32, #tpu.memory_space<vmem>>, %arg2: memref<104x72xf32, #tpu.memory_space<vmem>>, %arg3: memref<8x128xf32, #tpu.memory_space<vmem>>) attributes {dimension_semantics = [#tpu.dimension_semantics<parallel>], iteration_bounds = array<i64: 1>, scalar_prefetch = 0 : i64, scratch_operands = 0 : i64, tpu.core_type = #tpu.core_type<tc>, window_params = [{transform_indices = @transform_0, window_bounds = array<i64: 8, 32, 128>}, {pipeline_mode = #tpu.pipeline_mode<synchronous>, transform_indices = @transform_1, window_bounds = array<i64: 104, 72>}, {transform_indices = @transform_2, window_bounds = array<i64: 8, 128>}]} {
    %c0 = arith.constant 0 : index
    %c0_0 = arith.constant 0 : index
    %0 = vector.load %arg2[%c0, %c0_0] : memref<104x72xf32, #tpu.memory_space<vmem>>, vector<32x72xf32>
    %c32 = arith.constant 32 : index
    %c0_1 = arith.constant 0 : index
    %1 = vector.load %arg2[%c32, %c0_1] : memref<104x72xf32, #tpu.memory_space<vmem>>, vector<32x72xf32>
    %c64 = arith.constant 64 : index
    %c0_2 = arith.constant 0 : index
    %2 = vector.load %arg2[%c64, %c0_2] : memref<104x72xf32, #tpu.memory_space<vmem>>, vector<32x72xf32>
    %c96 = arith.constant 96 : index
    %c0_3 = arith.constant 0 : index
    %3 = vector.load %arg2[%c96, %c0_3] : memref<104x72xf32, #tpu.memory_space<vmem>>, vector<8x40xf32>
    %cst = arith.constant 1.000000e+00 : f32
    %4 = vector.broadcast %cst : f32 to vector<8x128xf32>
    %cst_4 = arith.constant 0.000000e+00 : f32
    %5 = vector.broadcast %cst_4 : f32 to vector<32x128xf32>
    %cst_5 = arith.constant 0.000000e+00 : f32
    %6 = vector.broadcast %cst_5 : f32 to vector<32x128xf32>
    %cst_6 = arith.constant 0.000000e+00 : f32
    %7 = vector.broadcast %cst_6 : f32 to vector<32x128xf32>
    %c0_7 = arith.constant 0 : index
    %c0_8 = arith.constant 0 : index
    %c0_9 = arith.constant 0 : index
    %8 = vector.load %arg1[%c0_7, %c0_8, %c0_9] : memref<8x32x128xf32, #tpu.memory_space<vmem>>, vector<1x32x128xf32>
    %9 = vector.shape_cast %8 : vector<1x32x128xf32> to vector<32x128xf32>
    %10 = tpu.concatenate %9, %5, %4 in 0 : vector<32x128xf32>, vector<32x128xf32>, vector<8x128xf32> -> vector<72x128xf32>
    %cst_10 = arith.constant dense<0.000000e+00> : vector<32x128xf32>
    %11 = tpu.matmul %0, %10, %cst_10 {dimension_numbers = #tpu.dot_dimension_numbers<[1], [0], [0], [1], [0, 0, 1, 1], [], []>} : vector<32x72xf32>, vector<72x128xf32>, vector<32x128xf32> -> vector<32x128xf32>
    %cst_11 = arith.constant 0.000000e+00 : f32
    %12 = vector.broadcast %cst_11 : f32 to vector<32x128xf32>
    %13 = arith.maximumf %11, %12 : vector<32x128xf32>
    %c1 = arith.constant 1 : index
    %c0_12 = arith.constant 0 : index
    %c0_13 = arith.constant 0 : index
    %14 = vector.load %arg1[%c1, %c0_12, %c0_13] : memref<8x32x128xf32, #tpu.memory_space<vmem>>, vector<1x32x128xf32>
    %15 = vector.shape_cast %14 : vector<1x32x128xf32> to vector<32x128xf32>
    %16 = tpu.concatenate %15, %13, %4 in 0 : vector<32x128xf32>, vector<32x128xf32>, vector<8x128xf32> -> vector<72x128xf32>
    %cst_14 = arith.constant dense<0.000000e+00> : vector<32x128xf32>
    %17 = tpu.matmul %0, %16, %cst_14 {dimension_numbers = #tpu.dot_dimension_numbers<[1], [0], [0], [1], [0, 0, 1, 1], [], []>} : vector<32x72xf32>, vector<72x128xf32>, vector<32x128xf32> -> vector<32x128xf32>
    %cst_15 = arith.constant 0.000000e+00 : f32
    %18 = vector.broadcast %cst_15 : f32 to vector<32x128xf32>
    %19 = arith.maximumf %17, %18 : vector<32x128xf32>
    %20 = tpu.concatenate %13, %6, %4 in 0 : vector<32x128xf32>, vector<32x128xf32>, vector<8x128xf32> -> vector<72x128xf32>
    %cst_16 = arith.constant dense<0.000000e+00> : vector<32x128xf32>
    %21 = tpu.matmul %1, %20, %cst_16 {dimension_numbers = #tpu.dot_dimension_numbers<[1], [0], [0], [1], [0, 0, 1, 1], [], []>} : vector<32x72xf32>, vector<72x128xf32>, vector<32x128xf32> -> vector<32x128xf32>
    %cst_17 = arith.constant 0.000000e+00 : f32
    %22 = vector.broadcast %cst_17 : f32 to vector<32x128xf32>
    %23 = arith.maximumf %21, %22 : vector<32x128xf32>
    %c2 = arith.constant 2 : index
    %c0_18 = arith.constant 0 : index
    %c0_19 = arith.constant 0 : index
    %24 = vector.load %arg1[%c2, %c0_18, %c0_19] : memref<8x32x128xf32, #tpu.memory_space<vmem>>, vector<1x32x128xf32>
    %25 = vector.shape_cast %24 : vector<1x32x128xf32> to vector<32x128xf32>
    %26 = tpu.concatenate %25, %19, %4 in 0 : vector<32x128xf32>, vector<32x128xf32>, vector<8x128xf32> -> vector<72x128xf32>
    %cst_20 = arith.constant dense<0.000000e+00> : vector<32x128xf32>
    %27 = tpu.matmul %0, %26, %cst_20 {dimension_numbers = #tpu.dot_dimension_numbers<[1], [0], [0], [1], [0, 0, 1, 1], [], []>} : vector<32x72xf32>, vector<72x128xf32>, vector<32x128xf32> -> vector<32x128xf32>
    %cst_21 = arith.constant 0.000000e+00 : f32
    %28 = vector.broadcast %cst_21 : f32 to vector<32x128xf32>
    %29 = arith.maximumf %27, %28 : vector<32x128xf32>
    %30 = tpu.concatenate %19, %23, %4 in 0 : vector<32x128xf32>, vector<32x128xf32>, vector<8x128xf32> -> vector<72x128xf32>
    %cst_22 = arith.constant dense<0.000000e+00> : vector<32x128xf32>
    %31 = tpu.matmul %1, %30, %cst_22 {dimension_numbers = #tpu.dot_dimension_numbers<[1], [0], [0], [1], [0, 0, 1, 1], [], []>} : vector<32x72xf32>, vector<72x128xf32>, vector<32x128xf32> -> vector<32x128xf32>
    %cst_23 = arith.constant 0.000000e+00 : f32
    %32 = vector.broadcast %cst_23 : f32 to vector<32x128xf32>
    %33 = arith.maximumf %31, %32 : vector<32x128xf32>
    %34 = tpu.concatenate %23, %7, %4 in 0 : vector<32x128xf32>, vector<32x128xf32>, vector<8x128xf32> -> vector<72x128xf32>
    %cst_24 = arith.constant dense<0.000000e+00> : vector<32x128xf32>
    %35 = tpu.matmul %2, %34, %cst_24 {dimension_numbers = #tpu.dot_dimension_numbers<[1], [0], [0], [1], [0, 0, 1, 1], [], []>} : vector<32x72xf32>, vector<72x128xf32>, vector<32x128xf32> -> vector<32x128xf32>
    %cst_25 = arith.constant 0.000000e+00 : f32
    %36 = vector.broadcast %cst_25 : f32 to vector<32x128xf32>
    %37 = arith.maximumf %35, %36 : vector<32x128xf32>
    %c3 = arith.constant 3 : index
    %c0_26 = arith.constant 0 : index
    %c0_27 = arith.constant 0 : index
    %38 = vector.load %arg1[%c3, %c0_26, %c0_27] : memref<8x32x128xf32, #tpu.memory_space<vmem>>, vector<1x32x128xf32>
    %39 = vector.shape_cast %38 : vector<1x32x128xf32> to vector<32x128xf32>
    %40 = tpu.concatenate %39, %29, %4 in 0 : vector<32x128xf32>, vector<32x128xf32>, vector<8x128xf32> -> vector<72x128xf32>
    %cst_28 = arith.constant dense<0.000000e+00> : vector<32x128xf32>
    %41 = tpu.matmul %0, %40, %cst_28 {dimension_numbers = #tpu.dot_dimension_numbers<[1], [0], [0], [1], [0, 0, 1, 1], [], []>} : vector<32x72xf32>, vector<72x128xf32>, vector<32x128xf32> -> vector<32x128xf32>
    %cst_29 = arith.constant 0.000000e+00 : f32
    %42 = vector.broadcast %cst_29 : f32 to vector<32x128xf32>
    %43 = arith.maximumf %41, %42 : vector<32x128xf32>
    %44 = tpu.concatenate %29, %33, %4 in 0 : vector<32x128xf32>, vector<32x128xf32>, vector<8x128xf32> -> vector<72x128xf32>
    %cst_30 = arith.constant dense<0.000000e+00> : vector<32x128xf32>
    %45 = tpu.matmul %1, %44, %cst_30 {dimension_numbers = #tpu.dot_dimension_numbers<[1], [0], [0], [1], [0, 0, 1, 1], [], []>} : vector<32x72xf32>, vector<72x128xf32>, vector<32x128xf32> -> vector<32x128xf32>
    %cst_31 = arith.constant 0.000000e+00 : f32
    %46 = vector.broadcast %cst_31 : f32 to vector<32x128xf32>
    %47 = arith.maximumf %45, %46 : vector<32x128xf32>
    %48 = tpu.concatenate %33, %37, %4 in 0 : vector<32x128xf32>, vector<32x128xf32>, vector<8x128xf32> -> vector<72x128xf32>
    %cst_32 = arith.constant dense<0.000000e+00> : vector<32x128xf32>
    %49 = tpu.matmul %2, %48, %cst_32 {dimension_numbers = #tpu.dot_dimension_numbers<[1], [0], [0], [1], [0, 0, 1, 1], [], []>} : vector<32x72xf32>, vector<72x128xf32>, vector<32x128xf32> -> vector<32x128xf32>
    %cst_33 = arith.constant 0.000000e+00 : f32
    %50 = vector.broadcast %cst_33 : f32 to vector<32x128xf32>
    %51 = arith.maximumf %49, %50 : vector<32x128xf32>
    %c4 = arith.constant 4 : index
    %c0_34 = arith.constant 0 : index
    %c0_35 = arith.constant 0 : index
    %52 = vector.load %arg1[%c4, %c0_34, %c0_35] : memref<8x32x128xf32, #tpu.memory_space<vmem>>, vector<1x32x128xf32>
    %53 = vector.shape_cast %52 : vector<1x32x128xf32> to vector<32x128xf32>
    %54 = tpu.concatenate %53, %43, %4 in 0 : vector<32x128xf32>, vector<32x128xf32>, vector<8x128xf32> -> vector<72x128xf32>
    %cst_36 = arith.constant dense<0.000000e+00> : vector<32x128xf32>
    %55 = tpu.matmul %0, %54, %cst_36 {dimension_numbers = #tpu.dot_dimension_numbers<[1], [0], [0], [1], [0, 0, 1, 1], [], []>} : vector<32x72xf32>, vector<72x128xf32>, vector<32x128xf32> -> vector<32x128xf32>
    %cst_37 = arith.constant 0.000000e+00 : f32
    %56 = vector.broadcast %cst_37 : f32 to vector<32x128xf32>
    %57 = arith.maximumf %55, %56 : vector<32x128xf32>
    %58 = tpu.concatenate %43, %47, %4 in 0 : vector<32x128xf32>, vector<32x128xf32>, vector<8x128xf32> -> vector<72x128xf32>
    %cst_38 = arith.constant dense<0.000000e+00> : vector<32x128xf32>
    %59 = tpu.matmul %1, %58, %cst_38 {dimension_numbers = #tpu.dot_dimension_numbers<[1], [0], [0], [1], [0, 0, 1, 1], [], []>} : vector<32x72xf32>, vector<72x128xf32>, vector<32x128xf32> -> vector<32x128xf32>
    %cst_39 = arith.constant 0.000000e+00 : f32
    %60 = vector.broadcast %cst_39 : f32 to vector<32x128xf32>
    %61 = arith.maximumf %59, %60 : vector<32x128xf32>
    %62 = tpu.concatenate %47, %51, %4 in 0 : vector<32x128xf32>, vector<32x128xf32>, vector<8x128xf32> -> vector<72x128xf32>
    %cst_40 = arith.constant dense<0.000000e+00> : vector<32x128xf32>
    %63 = tpu.matmul %2, %62, %cst_40 {dimension_numbers = #tpu.dot_dimension_numbers<[1], [0], [0], [1], [0, 0, 1, 1], [], []>} : vector<32x72xf32>, vector<72x128xf32>, vector<32x128xf32> -> vector<32x128xf32>
    %cst_41 = arith.constant 0.000000e+00 : f32
    %64 = vector.broadcast %cst_41 : f32 to vector<32x128xf32>
    %65 = arith.maximumf %63, %64 : vector<32x128xf32>
    %c5 = arith.constant 5 : index
    %c0_42 = arith.constant 0 : index
    %c0_43 = arith.constant 0 : index
    %66 = vector.load %arg1[%c5, %c0_42, %c0_43] : memref<8x32x128xf32, #tpu.memory_space<vmem>>, vector<1x32x128xf32>
    %67 = vector.shape_cast %66 : vector<1x32x128xf32> to vector<32x128xf32>
    %68 = tpu.concatenate %67, %57, %4 in 0 : vector<32x128xf32>, vector<32x128xf32>, vector<8x128xf32> -> vector<72x128xf32>
    %cst_44 = arith.constant dense<0.000000e+00> : vector<32x128xf32>
    %69 = tpu.matmul %0, %68, %cst_44 {dimension_numbers = #tpu.dot_dimension_numbers<[1], [0], [0], [1], [0, 0, 1, 1], [], []>} : vector<32x72xf32>, vector<72x128xf32>, vector<32x128xf32> -> vector<32x128xf32>
    %cst_45 = arith.constant 0.000000e+00 : f32
    %70 = vector.broadcast %cst_45 : f32 to vector<32x128xf32>
    %71 = arith.maximumf %69, %70 : vector<32x128xf32>
    %72 = tpu.concatenate %57, %61, %4 in 0 : vector<32x128xf32>, vector<32x128xf32>, vector<8x128xf32> -> vector<72x128xf32>
    %cst_46 = arith.constant dense<0.000000e+00> : vector<32x128xf32>
    %73 = tpu.matmul %1, %72, %cst_46 {dimension_numbers = #tpu.dot_dimension_numbers<[1], [0], [0], [1], [0, 0, 1, 1], [], []>} : vector<32x72xf32>, vector<72x128xf32>, vector<32x128xf32> -> vector<32x128xf32>
    %cst_47 = arith.constant 0.000000e+00 : f32
    %74 = vector.broadcast %cst_47 : f32 to vector<32x128xf32>
    %75 = arith.maximumf %73, %74 : vector<32x128xf32>
    %76 = tpu.concatenate %61, %65, %4 in 0 : vector<32x128xf32>, vector<32x128xf32>, vector<8x128xf32> -> vector<72x128xf32>
    %cst_48 = arith.constant dense<0.000000e+00> : vector<32x128xf32>
    %77 = tpu.matmul %2, %76, %cst_48 {dimension_numbers = #tpu.dot_dimension_numbers<[1], [0], [0], [1], [0, 0, 1, 1], [], []>} : vector<32x72xf32>, vector<72x128xf32>, vector<32x128xf32> -> vector<32x128xf32>
    %cst_49 = arith.constant 0.000000e+00 : f32
    %78 = vector.broadcast %cst_49 : f32 to vector<32x128xf32>
    %79 = arith.maximumf %77, %78 : vector<32x128xf32>
    %c6 = arith.constant 6 : index
    %c0_50 = arith.constant 0 : index
    %c0_51 = arith.constant 0 : index
    %80 = vector.load %arg1[%c6, %c0_50, %c0_51] : memref<8x32x128xf32, #tpu.memory_space<vmem>>, vector<1x32x128xf32>
    %81 = vector.shape_cast %80 : vector<1x32x128xf32> to vector<32x128xf32>
    %82 = tpu.concatenate %81, %71, %4 in 0 : vector<32x128xf32>, vector<32x128xf32>, vector<8x128xf32> -> vector<72x128xf32>
    %cst_52 = arith.constant dense<0.000000e+00> : vector<32x128xf32>
    %83 = tpu.matmul %0, %82, %cst_52 {dimension_numbers = #tpu.dot_dimension_numbers<[1], [0], [0], [1], [0, 0, 1, 1], [], []>} : vector<32x72xf32>, vector<72x128xf32>, vector<32x128xf32> -> vector<32x128xf32>
    %cst_53 = arith.constant 0.000000e+00 : f32
    %84 = vector.broadcast %cst_53 : f32 to vector<32x128xf32>
    %85 = arith.maximumf %83, %84 : vector<32x128xf32>
    %86 = tpu.concatenate %71, %75, %4 in 0 : vector<32x128xf32>, vector<32x128xf32>, vector<8x128xf32> -> vector<72x128xf32>
    %cst_54 = arith.constant dense<0.000000e+00> : vector<32x128xf32>
    %87 = tpu.matmul %1, %86, %cst_54 {dimension_numbers = #tpu.dot_dimension_numbers<[1], [0], [0], [1], [0, 0, 1, 1], [], []>} : vector<32x72xf32>, vector<72x128xf32>, vector<32x128xf32> -> vector<32x128xf32>
    %cst_55 = arith.constant 0.000000e+00 : f32
    %88 = vector.broadcast %cst_55 : f32 to vector<32x128xf32>
    %89 = arith.maximumf %87, %88 : vector<32x128xf32>
    %90 = tpu.concatenate %75, %79, %4 in 0 : vector<32x128xf32>, vector<32x128xf32>, vector<8x128xf32> -> vector<72x128xf32>
    %cst_56 = arith.constant dense<0.000000e+00> : vector<32x128xf32>
    %91 = tpu.matmul %2, %90, %cst_56 {dimension_numbers = #tpu.dot_dimension_numbers<[1], [0], [0], [1], [0, 0, 1, 1], [], []>} : vector<32x72xf32>, vector<72x128xf32>, vector<32x128xf32> -> vector<32x128xf32>
    %cst_57 = arith.constant 0.000000e+00 : f32
    %92 = vector.broadcast %cst_57 : f32 to vector<32x128xf32>
    %93 = arith.maximumf %91, %92 : vector<32x128xf32>
    %c7 = arith.constant 7 : index
    %c0_58 = arith.constant 0 : index
    %c0_59 = arith.constant 0 : index
    %94 = vector.load %arg1[%c7, %c0_58, %c0_59] : memref<8x32x128xf32, #tpu.memory_space<vmem>>, vector<1x32x128xf32>
    %95 = vector.shape_cast %94 : vector<1x32x128xf32> to vector<32x128xf32>
    %96 = tpu.concatenate %95, %85, %4 in 0 : vector<32x128xf32>, vector<32x128xf32>, vector<8x128xf32> -> vector<72x128xf32>
    %cst_60 = arith.constant dense<0.000000e+00> : vector<32x128xf32>
    %97 = tpu.matmul %0, %96, %cst_60 {dimension_numbers = #tpu.dot_dimension_numbers<[1], [0], [0], [1], [0, 0, 1, 1], [], []>} : vector<32x72xf32>, vector<72x128xf32>, vector<32x128xf32> -> vector<32x128xf32>
    %cst_61 = arith.constant 0.000000e+00 : f32
    %98 = vector.broadcast %cst_61 : f32 to vector<32x128xf32>
    %99 = arith.maximumf %97, %98 : vector<32x128xf32>
    %100 = tpu.concatenate %85, %89, %4 in 0 : vector<32x128xf32>, vector<32x128xf32>, vector<8x128xf32> -> vector<72x128xf32>
    %cst_62 = arith.constant dense<0.000000e+00> : vector<32x128xf32>
    %101 = tpu.matmul %1, %100, %cst_62 {dimension_numbers = #tpu.dot_dimension_numbers<[1], [0], [0], [1], [0, 0, 1, 1], [], []>} : vector<32x72xf32>, vector<72x128xf32>, vector<32x128xf32> -> vector<32x128xf32>
    %cst_63 = arith.constant 0.000000e+00 : f32
    %102 = vector.broadcast %cst_63 : f32 to vector<32x128xf32>
    %103 = arith.maximumf %101, %102 : vector<32x128xf32>
    %104 = tpu.concatenate %89, %93, %4 in 0 : vector<32x128xf32>, vector<32x128xf32>, vector<8x128xf32> -> vector<72x128xf32>
    %cst_64 = arith.constant dense<0.000000e+00> : vector<32x128xf32>
    %105 = tpu.matmul %2, %104, %cst_64 {dimension_numbers = #tpu.dot_dimension_numbers<[1], [0], [0], [1], [0, 0, 1, 1], [], []>} : vector<32x72xf32>, vector<72x128xf32>, vector<32x128xf32> -> vector<32x128xf32>
    %cst_65 = arith.constant 0.000000e+00 : f32
    %106 = vector.broadcast %cst_65 : f32 to vector<32x128xf32>
    %107 = arith.maximumf %105, %106 : vector<32x128xf32>
    %108 = tpu.concatenate %99, %103, %4 in 0 : vector<32x128xf32>, vector<32x128xf32>, vector<8x128xf32> -> vector<72x128xf32>
    %cst_66 = arith.constant dense<0.000000e+00> : vector<32x128xf32>
    %109 = tpu.matmul %1, %108, %cst_66 {dimension_numbers = #tpu.dot_dimension_numbers<[1], [0], [0], [1], [0, 0, 1, 1], [], []>} : vector<32x72xf32>, vector<72x128xf32>, vector<32x128xf32> -> vector<32x128xf32>
    %cst_67 = arith.constant 0.000000e+00 : f32
    %110 = vector.broadcast %cst_67 : f32 to vector<32x128xf32>
    %111 = arith.maximumf %109, %110 : vector<32x128xf32>
    %112 = tpu.concatenate %103, %107, %4 in 0 : vector<32x128xf32>, vector<32x128xf32>, vector<8x128xf32> -> vector<72x128xf32>
    %cst_68 = arith.constant dense<0.000000e+00> : vector<32x128xf32>
    %113 = tpu.matmul %2, %112, %cst_68 {dimension_numbers = #tpu.dot_dimension_numbers<[1], [0], [0], [1], [0, 0, 1, 1], [], []>} : vector<32x72xf32>, vector<72x128xf32>, vector<32x128xf32> -> vector<32x128xf32>
    %cst_69 = arith.constant 0.000000e+00 : f32
    %114 = vector.broadcast %cst_69 : f32 to vector<32x128xf32>
    %115 = arith.maximumf %113, %114 : vector<32x128xf32>
    %116 = tpu.concatenate %111, %115, %4 in 0 : vector<32x128xf32>, vector<32x128xf32>, vector<8x128xf32> -> vector<72x128xf32>
    %cst_70 = arith.constant dense<0.000000e+00> : vector<32x128xf32>
    %117 = tpu.matmul %2, %116, %cst_70 {dimension_numbers = #tpu.dot_dimension_numbers<[1], [0], [0], [1], [0, 0, 1, 1], [], []>} : vector<32x72xf32>, vector<72x128xf32>, vector<32x128xf32> -> vector<32x128xf32>
    %cst_71 = arith.constant 0.000000e+00 : f32
    %118 = vector.broadcast %cst_71 : f32 to vector<32x128xf32>
    %119 = arith.maximumf %117, %118 : vector<32x128xf32>
    %120 = tpu.concatenate %119, %4 in 0 : vector<32x128xf32>, vector<8x128xf32> -> vector<40x128xf32>
    %cst_72 = arith.constant dense<0.000000e+00> : vector<8x128xf32>
    %121 = tpu.matmul %3, %120, %cst_72 {dimension_numbers = #tpu.dot_dimension_numbers<[1], [0], [0], [1], [0, 0, 1, 1], [], []>} : vector<8x40xf32>, vector<40x128xf32>, vector<8x128xf32> -> vector<8x128xf32>
    %c0_73 = arith.constant 0 : index
    %c0_74 = arith.constant 0 : index
    %122 = vector.load %arg3[%c0_73, %c0_74] : memref<8x128xf32, #tpu.memory_space<vmem>>, vector<8x128xf32>
    tpu.vector_store %arg3[%c0_73, %c0_74], %121 {strides = array<i32>} : memref<8x128xf32, #tpu.memory_space<vmem>>, vector<8x128xf32>,
    return
  }
  func.func @transform_0(%arg0: i32) -> (i32, i32, i32) {
    %c0_i32 = arith.constant 0 : i32
    %c0_i32_0 = arith.constant 0 : i32
    %c0_i32_1 = arith.constant 0 : i32
    return %c0_i32, %c0_i32_0, %arg0 : i32, i32, i32
  }
  func.func @transform_1(%arg0: i32) -> (i32, i32) {
    %c0_i32 = arith.constant 0 : i32
    %c0_i32_0 = arith.constant 0 : i32
    %c0_i32_1 = arith.constant 0 : i32
    return %c0_i32, %c0_i32_0 : i32, i32
  }
  func.func @transform_2(%arg0: i32) -> (i32, i32) {
    %c0_i32 = arith.constant 0 : i32
    %c0_i32_0 = arith.constant 0 : i32
    return %c0_i32, %arg0 : i32, i32
  }
}

</mosaic_0001>

<llo_original>
// kernel: tpu_custom_call.1
$region0: #{tpu_custom_call.1}
  #allocation0 [shape = 'u32[]', space=smem, size = 0x4, offset = 0x4, fixed_abs, tag = 'smem constant byte address 0x4 - core index']
  #allocation1 [shape = 'u32[144,128]{1,0:T(1,128)}', space=vmem, size = 0x12000, scoped, tag = 'internal scratch']
  %s0 = inlined_call_operand.hbm [shape: f32[8,32,128], index: 0, kind: input, shape index: {}]
  %s1 = inlined_call_operand.vmem [shape: f32[104,72], index: 1, kind: input, shape index: {}]
  %s2 = inlined_call_operand.hbm [shape: f32[8,128], index: 2, kind: output, shape index: {}]
  %s3 = sld [smem:[#allocation0]]
  $region22: #{tpu_custom_call.1} parent=0
    _
  %s5 = ssub.s32 1, %s3
  %s6 = scalar_select 0, %s5, %s3
  $region1: #{tpu_custom_call.1} parent=0
    #allocation2 [shape = 'u8[131072]{0}', space=vmem, size = 0x20000, scoped, tag = 'input window, operand 0, single buffered']
    #allocation3 [shape = 's32[1]{0}', space=sflag, size = 0x4, scoped, tag = 'scoped memory for tpu_custom_call.1']
    #allocation4 [shape = 's32[1]{0}', space=sflag, size = 0x4, scoped, tag = 'scoped memory for tpu_custom_call.1']
    #allocation5 [shape = 'u8[4096]{0}', space=vmem, size = 0x1000, scoped, tag = 'output window, operand 0, single buffered']
    %7 = vsyncpa [#allocation3], 0
    %8 = vsyncpa [#allocation4], 0
    // Predicated region
    $region2: #{tpu_custom_call.1} parent=1 // pred_check
      _
    $region3: #{tpu_custom_call.1} parent=1 // pred_check_branch
      %10 = sbr.rel (0) target = $region5
    $region4: #{tpu_custom_call.1} parent=1 // pred_region
      %s12 = ssub.s32 4096, 4096
      %13 = vsyncadd [#allocation3], %s12
      %s14 = sshll.u32 [#allocation2], 4
      %s15 = int_to_ptr.vmem [resolvable:$true] %s14
      %20 = dma.hbm_to_vmem [thread:$0]  %s0, 4096, %s15, [#allocation3], 128, 128, 8
    $region5: #{tpu_custom_call.1} parent=1 // pred_fallthru
      _
    // Predicated region
    $region6: #{tpu_custom_call.1} parent=1 // pred_check
      _
    $region7: #{tpu_custom_call.1} parent=1 // pred_check_branch
      %22 = sbr.rel (0) target = $region9
    $region8: #{tpu_custom_call.1} parent=1 // pred_region
      _
    $region9: #{tpu_custom_call.1} parent=1 // pred_fallthru
      _
    // Predicated region
    $region10: #{tpu_custom_call.1} parent=1 // pred_check
      _
    $region11: #{tpu_custom_call.1} parent=1 // pred_check_branch
      %24 = sbr.rel (0) target = $region13
    $region12: #{tpu_custom_call.1} parent=1 // pred_region
      %25 = dma.done [#allocation3], 4096
    $region13: #{tpu_custom_call.1} parent=1 // pred_fallthru
      _
    %v26 = vld [vmem:[%s1] sm:$0xff]
    %v27 = vld [vmem:[%s1 + $0x8] sm:$0xff]
    %v28 = vld [vmem:[%s1 + $0x10] sm:$0xff]
    %v29 = vld [vmem:[%s1 + $0x18] sm:$0xff]
    %v30 = vld [vmem:[%s1 + $0x20] sm:$0xff]
    %v31 = vld [vmem:[%s1 + $0x28] sm:$0xff]
    %v32 = vld [vmem:[%s1 + $0x30] sm:$0xff]
    %v33 = vld [vmem:[%s1 + $0x38] sm:$0xff]
    %v34 = vld [vmem:[%s1 + $0x40] sm:$0xff]
    %v35 = vld [vmem:[%s1 + $0x48] sm:$0xff]
    %v36 = vld [vmem:[%s1 + $0x50] sm:$0xff]
    %v37 = vld [vmem:[%s1 + $0x58] sm:$0xff]
    %v38 = vld [vmem:[%s1 + $0x60] sm:$0xff]
    %v39 = vld [vmem:[#allocation2] sm:$0xff]
    %v40 = vld [vmem:[#allocation2 + $0x8] sm:$0xff]
    %v41 = vld [vmem:[#allocation2 + $0x10] sm:$0xff]
    %v42 = vld [vmem:[#allocation2 + $0x18] sm:$0xff]
    %vm43 = vcmask 588800
    %v45 = vsel %vm43, %v26, 0
    %v48 = vsel %vm43, %v27, 0
    %v51 = vsel %vm43, %v28, 0
    %v54 = vsel %vm43, %v29, 0
    %56 = vmatprep.subr.mxu0 0.0
    %57 = vmatpush1.msra.mxu0 %v39
    %58 = vmatprep.subr.mxu0 0.0
    %59 = vmatpush1.msra.mxu0 %v40
    %60 = vmatprep.subr.mxu0 0.0
    %61 = vmatpush1.msra.mxu0 %v41
    %62 = vmatprep.subr.mxu0 0.0
    %63 = vmatpush1.msra.mxu0 %v42
    %64 = vmatprep.subr.mxu0 0.0
    %65 = vmatpush1.msra.mxu0 0.0
    %66 = vmatprep.subr.mxu0 0.0
    %67 = vmatpush1.msra.mxu0 0.0
    %68 = vmatprep.subr.mxu0 0.0
    %69 = vmatpush1.msra.mxu0 0.0
    %70 = vmatprep.subr.mxu0 0.0
    %71 = vmatpush1.msra.mxu0 0.0
    %72 = vmatprep.subr.mxu0 0.0
    %73 = vmatpush1.msra.mxu0 1.0
    %74 = vmatprep.subr.mxu0 0.0
    %75 = vmatpush1.msra.mxu0 0.0
    %76 = vmatprep.subr.mxu0 0.0
    %77 = vmatpush1.msra.mxu0 0.0
    %78 = vmatprep.subr.mxu0 0.0
    %79 = vmatpush1.msra.mxu0 0.0
    %80 = vmatprep.subr.mxu0 0.0
    %81 = vmatpush1.msra.mxu0 0.0
    %82 = vmatprep.subr.mxu0 0.0
    %83 = vmatpush1.msra.mxu0 0.0
    %84 = vmatprep.subr.mxu0 0.0
    %85 = vmatpush1.msra.mxu0 0.0
    %86 = vmatprep.subr.mxu0 0.0
    %87 = vmatpush1.msra.mxu0 0.0
    %88 = vmatprep.subr.mxu0 0.0
    %89 = vmatpush1.msra.mxu0 0.0
    %90 = vmatprep.subr.mxu0 0.0
    %91 = vmatpush1.msra.mxu0 0.0
    %92 = vmatprep.subr.mxu0 0.0
    %93 = vmatpush1.msra.mxu0 0.0
    %94 = vmatprep.subr.mxu0 0.0
    %95 = vmatpush1.msra.mxu0 0.0
    %96 = vmatprep.subr.mxu0 0.0
    %97 = vmatpush1.msra.mxu0 0.0
    %98 = vmatprep.subr.mxu0 0.0
    %99 = vmatpush1.msra.mxu0 0.0
    %100 = vmatprep.subr.mxu0 0.0
    %101 = vmatpush1.msra.mxu0 0.0
    %102 = vmatprep.subr.mxu0 0.0
    %103 = vmatpush1.msra.mxu0 0.0
    %104 = vmatprep.subr.mxu0 0.0
    %105 = vmatpush1.msra.mxu0 0.0
    %106 = vmatprep.subr.mxu0 0.0
    %107 = vmatpush1.msra.mxu0 0.0
    %108 = vmatprep.subr.mxu0 0.0
    %109 = vmatpush1.msra.mxu0 0.0
    %110 = vmatprep.subr.mxu0 0.0
    %111 = vmatpush1.msra.mxu0 0.0
    %112 = vmatprep.subr.mxu0 0.0
    %113 = vmatpush1.msra.mxu0 0.0
    %114 = vmatprep.subr.mxu0 0.0
    %115 = vmatpush1.msra.mxu0 0.0
    %116 = vmatprep.subr.mxu0 0.0
    %117 = vmatpush1.msra.mxu0 0.0
    %118 = vmatprep.subr.mxu0 0.0
    %119 = vmatpush1.msra.mxu0 0.0
    %120 = vmatprep.mubr.f32.mxu0 0.0
    %121 = vmatmul.mubr.f32.gmra.mrb[0].mxu0 %v45
    %v122 = vpop.f32.mrb[0].mxu0
    %v123 = vadd.f32 0.0, %v122
    %v124 = vpop.f32.mrb[0].mxu0
    %125 = vmatprep.mubr.f32.mxu0 0.0
    %126 = vmatmul.mubr.f32.gmra.mrb[0].mxu0 %v48
    %v127 = vpop.f32.mrb[0].mxu0
    %v128 = vadd.f32 0.0, %v127
    %v129 = vpop.f32.mrb[0].mxu0
    %130 = vmatprep.mubr.f32.mxu0 0.0
    %131 = vmatmul.mubr.f32.gmra.mrb[0].mxu0 %v51
    %v132 = vpop.f32.mrb[0].mxu0
    %v133 = vadd.f32 0.0, %v132
    %v134 = vpop.f32.mrb[0].mxu0
    %135 = vmatprep.mubr.f32.mxu0 0.0
    %136 = vmatmul.mubr.f32.gmra.mrb[0].mxu0 %v54
    %v137 = vpop.f32.mrb[0].mxu0
    %v138 = vadd.f32 0.0, %v137
    %v139 = vpop.f32.mrb[0].mxu0
    %140 = vdwg.mxu0
    %v141 = vmax.f32 %v123, 0.0
    %v142 = vmax.f32 %v128, 0.0
    %v143 = vmax.f32 %v133, 0.0
    %v144 = vmax.f32 %v138, 0.0
    %s145 = scalar_lea.vmem [#allocation2], 32
    %v146 = vld [vmem:[%s145] sm:$0xff]
    %v147 = vld [vmem:[%s145 + $0x8] sm:$0xff]
    %v148 = vld [vmem:[%s145 + $0x10] sm:$0xff]
    %v149 = vld [vmem:[%s145 + $0x18] sm:$0xff]
    %150 = vmatprep.subr.mxu0 0.0
    %151 = vmatpush1.msra.mxu0 %v146
    %152 = vmatprep.subr.mxu0 0.0
    %153 = vmatpush1.msra.mxu0 %v147
    %154 = vmatprep.subr.mxu0 0.0
    %155 = vmatpush1.msra.mxu0 %v148
    %156 = vmatprep.subr.mxu0 0.0
    %157 = vmatpush1.msra.mxu0 %v149
    %158 = vmatprep.subr.mxu0 0.0
    %159 = vmatpush1.msra.mxu0 %v141
    %160 = vmatprep.subr.mxu0 0.0
    %161 = vmatpush1.msra.mxu0 %v142
    %162 = vmatprep.subr.mxu0 0.0
    %163 = vmatpush1.msra.mxu0 %v143
    %164 = vmatprep.subr.mxu0 0.0
    %165 = vmatpush1.msra.mxu0 %v144
    %166 = vmatprep.subr.mxu0 0.0
    %167 = vmatpush1.msra.mxu0 1.0
    %168 = vmatprep.subr.mxu0 0.0
    %169 = vmatpush1.msra.mxu0 0.0
    %170 = vmatprep.subr.mxu0 0.0
    %171 = vmatpush1.msra.mxu0 0.0
    %172 = vmatprep.subr.mxu0 0.0
    %173 = vmatpush1.msra.mxu0 0.0
    %174 = vmatprep.subr.mxu0 0.0
    %175 = vmatpush1.msra.mxu0 0.0
    %176 = vmatprep.subr.mxu0 0.0
    %177 = vmatpush1.msra.mxu0 0.0
    %178 = vmatprep.subr.mxu0 0.0
    %179 = vmatpush1.msra.mxu0 0.0
    %180 = vmatprep.subr.mxu0 0.0
    %181 = vmatpush1.msra.mxu0 0.0
    %182 = vmatprep.subr.mxu0 0.0
    %183 = vmatpush1.msra.mxu0 0.0
    %184 = vmatprep.subr.mxu0 0.0
    %185 = vmatpush1.msra.mxu0 0.0
    %186 = vmatprep.subr.mxu0 0.0
    %187 = vmatpush1.msra.mxu0 0.0
    %188 = vmatprep.subr.mxu0 0.0
    %189 = vmatpush1.msra.mxu0 0.0
    %190 = vmatprep.subr.mxu0 0.0
    %191 = vmatpush1.msra.mxu0 0.0
    %192 = vmatprep.subr.mxu0 0.0
    %193 = vmatpush1.msra.mxu0 0.0
    %194 = vmatprep.subr.mxu0 0.0
    %195 = vmatpush1.msra.mxu0 0.0
    %196 = vmatprep.subr.mxu0 0.0
    %197 = vmatpush1.msra.mxu0 0.0
    %198 = vmatprep.subr.mxu0 0.0
    %199 = vmatpush1.msra.mxu0 0.0
    %200 = vmatprep.subr.mxu0 0.0
    %201 = vmatpush1.msra.mxu0 0.0
    %202 = vmatprep.subr.mxu0 0.0
    %203 = vmatpush1.msra.mxu0 0.0
    %204 = vmatprep.subr.mxu0 0.0
    %205 = vmatpush1.msra.mxu0 0.0
    %206 = vmatprep.subr.mxu0 0.0
    %207 = vmatpush1.msra.mxu0 0.0
    %208 = vmatprep.subr.mxu0 0.0
    %209 = vmatpush1.msra.mxu0 0.0
    %210 = vmatprep.subr.mxu0 0.0
    %211 = vmatpush1.msra.mxu0 0.0
    %212 = vmatprep.subr.mxu0 0.0
    %213 = vmatpush1.msra.mxu0 0.0
    %214 = vmatprep.mubr.f32.mxu0 0.0
    %215 = vmatmul.mubr.f32.gmra.mrb[0].mxu0 %v45
    %v216 = vpop.f32.mrb[0].mxu0
    %v217 = vadd.f32 0.0, %v216
    %v218 = vpop.f32.mrb[0].mxu0
    %219 = vmatprep.mubr.f32.mxu0 0.0
    %220 = vmatmul.mubr.f32.gmra.mrb[0].mxu0 %v48
    %v221 = vpop.f32.mrb[0].mxu0
    %v222 = vadd.f32 0.0, %v221
    %v223 = vpop.f32.mrb[0].mxu0
    %224 = vmatprep.mubr.f32.mxu0 0.0
    %225 = vmatmul.mubr.f32.gmra.mrb[0].mxu0 %v51
    %v226 = vpop.f32.mrb[0].mxu0
    %v227 = vadd.f32 0.0, %v226
    %v228 = vpop.f32.mrb[0].mxu0
    %229 = vmatprep.mubr.f32.mxu0 0.0
    %230 = vmatmul.mubr.f32.gmra.mrb[0].mxu0 %v54
    %v231 = vpop.f32.mrb[0].mxu0
    %v232 = vadd.f32 0.0, %v231
    %v233 = vpop.f32.mrb[0].mxu0
    %234 = vdwg.mxu0
    %v235 = vmax.f32 %v217, 0.0
    %v236 = vmax.f32 %v222, 0.0
    %v237 = vmax.f32 %v227, 0.0
    %v238 = vmax.f32 %v232, 0.0
    %v240 = vsel %vm43, %v30, 0
    %v243 = vsel %vm43, %v31, 0
    %v246 = vsel %vm43, %v32, 0
    %v249 = vsel %vm43, %v33, 0
    %251 = vmatprep.subr.mxu0 0.0
    %252 = vmatpush1.msra.mxu0 %v141
    %253 = vmatprep.subr.mxu0 0.0
    %254 = vmatpush1.msra.mxu0 %v142
    %255 = vmatprep.subr.mxu0 0.0
    %256 = vmatpush1.msra.mxu0 %v143
    %257 = vmatprep.subr.mxu0 0.0
    %258 = vmatpush1.msra.mxu0 %v144
    %259 = vmatprep.subr.mxu0 0.0
    %260 = vmatpush1.msra.mxu0 0.0
    %261 = vmatprep.subr.mxu0 0.0
    %262 = vmatpush1.msra.mxu0 0.0
    %263 = vmatprep.subr.mxu0 0.0
    %264 = vmatpush1.msra.mxu0 0.0
    %265 = vmatprep.subr.mxu0 0.0
    %266 = vmatpush1.msra.mxu0 0.0
    %267 = vmatprep.subr.mxu0 0.0
    %268 = vmatpush1.msra.mxu0 1.0
    %269 = vmatprep.subr.mxu0 0.0
    %270 = vmatpush1.msra.mxu0 0.0
    %271 = vmatprep.subr.mxu0 0.0
    %272 = vmatpush1.msra.mxu0 0.0
    %273 = vmatprep.subr.mxu0 0.0
    %274 = vmatpush1.msra.mxu0 0.0
    %275 = vmatprep.subr.mxu0 0.0
    %276 = vmatpush1.msra.mxu0 0.0
    %277 = vmatprep.subr.mxu0 0.0
    %278 = vmatpush1.msra.mxu0 0.0
    %279 = vmatprep.subr.mxu0 0.0
    %280 = vmatpush1.msra.mxu0 0.0
    %281 = vmatprep.subr.mxu0 0.0
    %282 = vmatpush1.msra.mxu0 0.0
    %283 = vmatprep.subr.mxu0 0.0
    %284 = vmatpush1.msra.mxu0 0.0
    %285 = vmatprep.subr.mxu0 0.0
    %286 = vmatpush1.msra.mxu0 0.0
    %287 = vmatprep.subr.mxu0 0.0
    %288 = vmatpush1.msra.mxu0 0.0
    %289 = vmatprep.subr.mxu0 0.0
    %290 = vmatpush1.msra.mxu0 0.0
    %291 = vmatprep.subr.mxu0 0.0
    %292 = vmatpush1.msra.mxu0 0.0
    %293 = vmatprep.subr.mxu0 0.0
    %294 = vmatpush1.msra.mxu0 0.0
    %295 = vmatprep.subr.mxu0 0.0
    %296 = vmatpush1.msra.mxu0 0.0
    %297 = vmatprep.subr.mxu0 0.0
    %298 = vmatpush1.msra.mxu0 0.0
    %299 = vmatprep.subr.mxu0 0.0
    %300 = vmatpush1.msra.mxu0 0.0
    %301 = vmatprep.subr.mxu0 0.0
    %302 = vmatpush1.msra.mxu0 0.0
    %303 = vmatprep.subr.mxu0 0.0
    %304 = vmatpush1.msra.mxu0 0.0
    %305 = vmatprep.subr.mxu0 0.0
    %306 = vmatpush1.msra.mxu0 0.0
    %307 = vmatprep.subr.mxu0 0.0
    %308 = vmatpush1.msra.mxu0 0.0
    %309 = vmatprep.subr.mxu0 0.0
    %310 = vmatpush1.msra.mxu0 0.0
    %311 = vmatprep.subr.mxu0 0.0
    %312 = vmatpush1.msra.mxu0 0.0
    %313 = vmatprep.subr.mxu0 0.0
    %314 = vmatpush1.msra.mxu0 0.0
    %315 = vmatprep.mubr.f32.mxu0 0.0
    %316 = vmatmul.mubr.f32.gmra.mrb[0].mxu0 %v240
    %v317 = vpop.f32.mrb[0].mxu0
    %v318 = vadd.f32 0.0, %v317
    %v319 = vpop.f32.mrb[0].mxu0
    %320 = vmatprep.mubr.f32.mxu0 0.0
    %321 = vmatmul.mubr.f32.gmra.mrb[0].mxu0 %v243
    %v322 = vpop.f32.mrb[0].mxu0
    %v323 = vadd.f32 0.0, %v322
    %v324 = vpop.f32.mrb[0].mxu0
    %325 = vmatprep.mubr.f32.mxu0 0.0
    %326 = vmatmul.mubr.f32.gmra.mrb[0].mxu0 %v246
    %v327 = vpop.f32.mrb[0].mxu0
    %v328 = vadd.f32 0.0, %v327
    %v329 = vpop.f32.mrb[0].mxu0
    %330 = vmatprep.mubr.f32.mxu0 0.0
    %331 = vmatmul.mubr.f32.gmra.mrb[0].mxu0 %v249
    %v332 = vpop.f32.mrb[0].mxu0
    %v333 = vadd.f32 0.0, %v332
    %v334 = vpop.f32.mrb[0].mxu0
    %335 = vdwg.mxu0
    %v336 = vmax.f32 %v318, 0.0
    %v337 = vmax.f32 %v323, 0.0
    %v338 = vmax.f32 %v328, 0.0
    %v339 = vmax.f32 %v333, 0.0
    %s340 = scalar_lea.vmem [#allocation2], 64
    %v341 = vld [vmem:[%s340] sm:$0xff]
    %v342 = vld [vmem:[%s340 + $0x8] sm:$0xff]
    %v343 = vld [vmem:[%s340 + $0x10] sm:$0xff]
    %v344 = vld [vmem:[%s340 + $0x18] sm:$0xff]
    %345 = vmatprep.subr.mxu0 0.0
    %346 = vmatpush1.msra.mxu0 %v341
    %347 = vmatprep.subr.mxu0 0.0
    %348 = vmatpush1.msra.mxu0 %v342
    %349 = vmatprep.subr.mxu0 0.0
    %350 = vmatpush1.msra.mxu0 %v343
    %351 = vmatprep.subr.mxu0 0.0
    %352 = vmatpush1.msra.mxu0 %v344
    %353 = vmatprep.subr.mxu0 0.0
    %354 = vmatpush1.msra.mxu0 %v235
    %355 = vmatprep.subr.mxu0 0.0
    %356 = vmatpush1.msra.mxu0 %v236
    %357 = vmatprep.subr.mxu0 0.0
    %358 = vmatpush1.msra.mxu0 %v237
    %359 = vmatprep.subr.mxu0 0.0
    %360 = vmatpush1.msra.mxu0 %v238
    %361 = vmatprep.subr.mxu0 0.0
    %362 = vmatpush1.msra.mxu0 1.0
    %363 = vmatprep.subr.mxu0 0.0
    %364 = vmatpush1.msra.mxu0 0.0
    %365 = vmatprep.subr.mxu0 0.0
    %366 = vmatpush1.msra.mxu0 0.0
    %367 = vmatprep.subr.mxu0 0.0
    %368 = vmatpush1.msra.mxu0 0.0
    %369 = vmatprep.subr.mxu0 0.0
    %370 = vmatpush1.msra.mxu0 0.0
    %371 = vmatprep.subr.mxu0 0.0
    %372 = vmatpush1.msra.mxu0 0.0
    %373 = vmatprep.subr.mxu0 0.0
    %374 = vmatpush1.msra.mxu0 0.0
    %375 = vmatprep.subr.mxu0 0.0
    %376 = vmatpush1.msra.mxu0 0.0
    %377 = vmatprep.subr.mxu0 0.0
    %378 = vmatpush1.msra.mxu0 0.0
    %379 = vmatprep.subr.mxu0 0.0
    %380 = vmatpush1.msra.mxu0 0.0
    %381 = vmatprep.subr.mxu0 0.0
    %382 = vmatpush1.msra.mxu0 0.0
    %383 = vmatprep.subr.mxu0 0.0
    %384 = vmatpush1.msra.mxu0 0.0
    %385 = vmatprep.subr.mxu0 0.0
    %386 = vmatpush1.msra.mxu0 0.0
    %387 = vmatprep.subr.mxu0 0.0
    %388 = vmatpush1.msra.mxu0 0.0
    %389 = vmatprep.subr.mxu0 0.0
    %390 = vmatpush1.msra.mxu0 0.0
    %391 = vmatprep.subr.mxu0 0.0
    %392 = vmatpush1.msra.mxu0 0.0
    %393 = vmatprep.subr.mxu0 0.0
    %394 = vmatpush1.msra.mxu0 0.0
    %395 = vmatprep.subr.mxu0 0.0
    %396 = vmatpush1.msra.mxu0 0.0
    %397 = vmatprep.subr.mxu0 0.0
    %398 = vmatpush1.msra.mxu0 0.0
    %399 = vmatprep.subr.mxu0 0.0
    %400 = vmatpush1.msra.mxu0 0.0
    %401 = vmatprep.subr.mxu0 0.0
    %402 = vmatpush1.msra.mxu0 0.0
    %403 = vmatprep.subr.mxu0 0.0
    %404 = vmatpush1.msra.mxu0 0.0
    %405 = vmatprep.subr.mxu0 0.0
    %406 = vmatpush1.msra.mxu0 0.0
    %407 = vmatprep.subr.mxu0 0.0
    %408 = vmatpush1.msra.mxu0 0.0
    %409 = vmatprep.mubr.f32.mxu0 0.0
    %410 = vmatmul.mubr.f32.gmra.mrb[0].mxu0 %v45
    %v411 = vpop.f32.mrb[0].mxu0
    %v412 = vadd.f32 0.0, %v411
    %v413 = vpop.f32.mrb[0].mxu0
    %414 = vmatprep.mubr.f32.mxu0 0.0
    %415 = vmatmul.mubr.f32.gmra.mrb[0].mxu0 %v48
    %v416 = vpop.f32.mrb[0].mxu0
    %v417 = vadd.f32 0.0, %v416
    %v418 = vpop.f32.mrb[0].mxu0
    %419 = vmatprep.mubr.f32.mxu0 0.0
    %420 = vmatmul.mubr.f32.gmra.mrb[0].mxu0 %v51
    %v421 = vpop.f32.mrb[0].mxu0
    %v422 = vadd.f32 0.0, %v421
    %v423 = vpop.f32.mrb[0].mxu0
    %424 = vmatprep.mubr.f32.mxu0 0.0
    %425 = vmatmul.mubr.f32.gmra.mrb[0].mxu0 %v54
    %v426 = vpop.f32.mrb[0].mxu0
    %v427 = vadd.f32 0.0, %v426
    %v428 = vpop.f32.mrb[0].mxu0
    %429 = vdwg.mxu0
    %v430 = vmax.f32 %v412, 0.0
    %v431 = vmax.f32 %v417, 0.0
    %v432 = vmax.f32 %v422, 0.0
    %v433 = vmax.f32 %v427, 0.0
    %434 = vmatprep.subr.mxu0 0.0
    %435 = vmatpush1.msra.mxu0 %v235
    %436 = vmatprep.subr.mxu0 0.0
    %437 = vmatpush1.msra.mxu0 %v236
    %438 = vmatprep.subr.mxu0 0.0
    %439 = vmatpush1.msra.mxu0 %v237
    %440 = vmatprep.subr.mxu0 0.0
    %441 = vmatpush1.msra.mxu0 %v238
    %442 = vmatprep.subr.mxu0 0.0
    %443 = vmatpush1.msra.mxu0 %v336
    %444 = vmatprep.subr.mxu0 0.0
    %445 = vmatpush1.msra.mxu0 %v337
    %446 = vmatprep.subr.mxu0 0.0
    %447 = vmatpush1.msra.mxu0 %v338
    %448 = vmatprep.subr.mxu0 0.0
    %449 = vmatpush1.msra.mxu0 %v339
    %450 = vmatprep.subr.mxu0 0.0
    %451 = vmatpush1.msra.mxu0 1.0
    %452 = vmatprep.subr.mxu0 0.0
    %453 = vmatpush1.msra.mxu0 0.0
    %454 = vmatprep.subr.mxu0 0.0
    %455 = vmatpush1.msra.mxu0 0.0
    %456 = vmatprep.subr.mxu0 0.0
    %457 = vmatpush1.msra.mxu0 0.0
    %458 = vmatprep.subr.mxu0 0.0
    %459 = vmatpush1.msra.mxu0 0.0
    %460 = vmatprep.subr.mxu0 0.0
    %461 = vmatpush1.msra.mxu0 0.0
    %462 = vmatprep.subr.mxu0 0.0
    %463 = vmatpush1.msra.mxu0 0.0
    %464 = vmatprep.subr.mxu0 0.0
    %465 = vmatpush1.msra.mxu0 0.0
    %466 = vmatprep.subr.mxu0 0.0
    %467 = vmatpush1.msra.mxu0 0.0
    %468 = vmatprep.subr.mxu0 0.0
    %469 = vmatpush1.msra.mxu0 0.0
    %470 = vmatprep.subr.mxu0 0.0
    %471 = vmatpush1.msra.mxu0 0.0
    %472 = vmatprep.subr.mxu0 0.0
    %473 = vmatpush1.msra.mxu0 0.0
    %474 = vmatprep.subr.mxu0 0.0
    %475 = vmatpush1.msra.mxu0 0.0
    %476 = vmatprep.subr.mxu0 0.0
    %477 = vmatpush1.msra.mxu0 0.0
    %478 = vmatprep.subr.mxu0 0.0
    %479 = vmatpush1.msra.mxu0 0.0
    %480 = vmatprep.subr.mxu0 0.0
    %481 = vmatpush1.msra.mxu0 0.0
    %482 = vmatprep.subr.mxu0 0.0
    %483 = vmatpush1.msra.mxu0 0.0
    %484 = vmatprep.subr.mxu0 0.0
    %485 = vmatpush1.msra.mxu0 0.0
    %486 = vmatprep.subr.mxu0 0.0
    %487 = vmatpush1.msra.mxu0 0.0
    %488 = vmatprep.subr.mxu0 0.0
    %489 = vmatpush1.msra.mxu0 0.0
    %490 = vmatprep.subr.mxu0 0.0
    %491 = vmatpush1.msra.mxu0 0.0
    %492 = vmatprep.subr.mxu0 0.0
    %493 = vmatpush1.msra.mxu0 0.0
    %494 = vmatprep.subr.mxu0 0.0
    %495 = vmatpush1.msra.mxu0 0.0
    %496 = vmatprep.subr.mxu0 0.0
    %497 = vmatpush1.msra.mxu0 0.0
    %498 = vmatprep.mubr.f32.mxu0 0.0
    %499 = vmatmul.mubr.f32.gmra.mrb[0].mxu0 %v240
    %v500 = vpop.f32.mrb[0].mxu0
    %v501 = vadd.f32 0.0, %v500
    %v502 = vpop.f32.mrb[0].mxu0
    %503 = vmatprep.mubr.f32.mxu0 0.0
    %504 = vmatmul.mubr.f32.gmra.mrb[0].mxu0 %v243
    %v505 = vpop.f32.mrb[0].mxu0
    %v506 = vadd.f32 0.0, %v505
    %v507 = vpop.f32.mrb[0].mxu0
    %508 = vmatprep.mubr.f32.mxu0 0.0
    %509 = vmatmul.mubr.f32.gmra.mrb[0].mxu0 %v246
    %v510 = vpop.f32.mrb[0].mxu0
    %v511 = vadd.f32 0.0, %v510
    %v512 = vpop.f32.mrb[0].mxu0
    %513 = vmatprep.mubr.f32.mxu0 0.0
    %514 = vmatmul.mubr.f32.gmra.mrb[0].mxu0 %v249
    %v515 = vpop.f32.mrb[0].mxu0
    %v516 = vadd.f32 0.0, %v515
    %v517 = vpop.f32.mrb[0].mxu0
    %518 = vdwg.mxu0
    %v519 = vmax.f32 %v501, 0.0
    %v520 = vmax.f32 %v506, 0.0
    %v521 = vmax.f32 %v511, 0.0
    %v522 = vmax.f32 %v516, 0.0
    %v524 = vsel %vm43, %v34, 0
    %v527 = vsel %vm43, %v35, 0
    %v530 = vsel %vm43, %v36, 0
    %v533 = vsel %vm43, %v37, 0
    %535 = vmatprep.subr.mxu0 0.0
    %536 = vmatpush1.msra.mxu0 %v336
    %537 = vmatprep.subr.mxu0 0.0
    %538 = vmatpush1.msra.mxu0 %v337
    %539 = vmatprep.subr.mxu0 0.0
    %540 = vmatpush1.msra.mxu0 %v338
    %541 = vmatprep.subr.mxu0 0.0
    %542 = vmatpush1.msra.mxu0 %v339
    %543 = vmatprep.subr.mxu0 0.0
    %544 = vmatpush1.msra.mxu0 0.0
    %545 = vmatprep.subr.mxu0 0.0
    %546 = vmatpush1.msra.mxu0 0.0
    %547 = vmatprep.subr.mxu0 0.0
    %548 = vmatpush1.msra.mxu0 0.0
    %549 = vmatprep.subr.mxu0 0.0
    %550 = vmatpush1.msra.mxu0 0.0
    %551 = vmatprep.subr.mxu0 0.0
    %552 = vmatpush1.msra.mxu0 1.0
    %553 = vmatprep.subr.mxu0 0.0
    %554 = vmatpush1.msra.mxu0 0.0
    %555 = vmatprep.subr.mxu0 0.0
    %556 = vmatpush1.msra.mxu0 0.0
    %557 = vmatprep.subr.mxu0 0.0
    %558 = vmatpush1.msra.mxu0 0.0
    %559 = vmatprep.subr.mxu0 0.0
    %560 = vmatpush1.msra.mxu0 0.0
    %561 = vmatprep.subr.mxu0 0.0
    %562 = vmatpush1.msra.mxu0 0.0
    %563 = vmatprep.subr.mxu0 0.0
    %564 = vmatpush1.msra.mxu0 0.0
    %565 = vmatprep.subr.mxu0 0.0
    %566 = vmatpush1.msra.mxu0 0.0
    %567 = vmatprep.subr.mxu0 0.0
    %568 = vmatpush1.msra.mxu0 0.0
    %569 = vmatprep.subr.mxu0 0.0
    %570 = vmatpush1.msra.mxu0 0.0
    %571 = vmatprep.subr.mxu0 0.0
    %572 = vmatpush1.msra.mxu0 0.0
    %573 = vmatprep.subr.mxu0 0.0
    %574 = vmatpush1.msra.mxu0 0.0
    %575 = vmatprep.subr.mxu0 0.0
    %576 = vmatpush1.msra.mxu0 0.0
    %577 = vmatprep.subr.mxu0 0.0
    %578 = vmatpush1.msra.mxu0 0.0
    %579 = vmatprep.subr.mxu0 0.0
    %580 = vmatpush1.msra.mxu0 0.0
    %581 = vmatprep.subr.mxu0 0.0
    %582 = vmatpush1.msra.mxu0 0.0
    %583 = vmatprep.subr.mxu0 0.0
    %584 = vmatpush1.msra.mxu0 0.0
    %585 = vmatprep.subr.mxu0 0.0
    %586 = vmatpush1.msra.mxu0 0.0
    %587 = vmatprep.subr.mxu0 0.0
    %588 = vmatpush1.msra.mxu0 0.0
    %589 = vmatprep.subr.mxu0 0.0
    %590 = vmatpush1.msra.mxu0 0.0
    %591 = vmatprep.subr.mxu0 0.0
    %592 = vmatpush1.msra.mxu0 0.0
    %593 = vmatprep.subr.mxu0 0.0
    %594 = vmatpush1.msra.mxu0 0.0
    %595 = vmatprep.subr.mxu0 0.0
    %596 = vmatpush1.msra.mxu0 0.0
    %597 = vmatprep.subr.mxu0 0.0
    %598 = vmatpush1.msra.mxu0 0.0
    %599 = vmatprep.mubr.f32.mxu0 0.0
    %600 = vmatmul.mubr.f32.gmra.mrb[0].mxu0 %v524
    %v601 = vpop.f32.mrb[0].mxu0
    %v602 = vadd.f32 0.0, %v601
    %v603 = vpop.f32.mrb[0].mxu0
    %604 = vmatprep.mubr.f32.mxu0 0.0
    %605 = vmatmul.mubr.f32.gmra.mrb[0].mxu0 %v527
    %v606 = vpop.f32.mrb[0].mxu0
    %v607 = vadd.f32 0.0, %v606
    %v608 = vpop.f32.mrb[0].mxu0
    %609 = vmatprep.mubr.f32.mxu0 0.0
    %610 = vmatmul.mubr.f32.gmra.mrb[0].mxu0 %v530
    %v611 = vpop.f32.mrb[0].mxu0
    %v612 = vadd.f32 0.0, %v611
    %v613 = vpop.f32.mrb[0].mxu0
    %614 = vmatprep.mubr.f32.mxu0 0.0
    %615 = vmatmul.mubr.f32.gmra.mrb[0].mxu0 %v533
    %v616 = vpop.f32.mrb[0].mxu0
    %v617 = vadd.f32 0.0, %v616
    %v618 = vpop.f32.mrb[0].mxu0
    %619 = vdwg.mxu0
    %v620 = vmax.f32 %v602, 0.0
    %v621 = vmax.f32 %v607, 0.0
    %v622 = vmax.f32 %v612, 0.0
    %v623 = vmax.f32 %v617, 0.0
    %s624 = scalar_lea.vmem [#allocation2], 96
    %v625 = vld [vmem:[%s624] sm:$0xff]
    %v626 = vld [vmem:[%s624 + $0x8] sm:$0xff]
    %v627 = vld [vmem:[%s624 + $0x10] sm:$0xff]
    %v628 = vld [vmem:[%s624 + $0x18] sm:$0xff]
    %629 = vmatprep.subr.mxu0 0.0
    %630 = vmatpush1.msra.mxu0 %v625
    %631 = vmatprep.subr.mxu0 0.0
    %632 = vmatpush1.msra.mxu0 %v626
    %633 = vmatprep.subr.mxu0 0.0
    %634 = vmatpush1.msra.mxu0 %v627
    %635 = vmatprep.subr.mxu0 0.0
    %636 = vmatpush1.msra.mxu0 %v628
    %637 = vmatprep.subr.mxu0 0.0
    %638 = vmatpush1.msra.mxu0 %v430
    %639 = vmatprep.subr.mxu0 0.0
    %640 = vmatpush1.msra.mxu0 %v431
    %641 = vmatprep.subr.mxu0 0.0
    %642 = vmatpush1.msra.mxu0 %v432
    %643 = vmatprep.subr.mxu0 0.0
    %644 = vmatpush1.msra.mxu0 %v433
    %645 = vmatprep.subr.mxu0 0.0
    %646 = vmatpush1.msra.mxu0 1.0
    %647 = vmatprep.subr.mxu0 0.0
    %648 = vmatpush1.msra.mxu0 0.0
    %649 = vmatprep.subr.mxu0 0.0
    %650 = vmatpush1.msra.mxu0 0.0
    %651 = vmatprep.subr.mxu0 0.0
    %652 = vmatpush1.msra.mxu0 0.0
    %653 = vmatprep.subr.mxu0 0.0
    %654 = vmatpush1.msra.mxu0 0.0
    %655 = vmatprep.subr.mxu0 0.0
    %656 = vmatpush1.msra.mxu0 0.0
    %657 = vmatprep.subr.mxu0 0.0
    %658 = vmatpush1.msra.mxu0 0.0
    %659 = vmatprep.subr.mxu0 0.0
    %660 = vmatpush1.msra.mxu0 0.0
    %661 = vmatprep.subr.mxu0 0.0
    %662 = vmatpush1.msra.mxu0 0.0
    %663 = vmatprep.subr.mxu0 0.0
    %664 = vmatpush1.msra.mxu0 0.0
    %665 = vmatprep.subr.mxu0 0.0
    %666 = vmatpush1.msra.mxu0 0.0
    %667 = vmatprep.subr.mxu0 0.0
    %668 = vmatpush1.msra.mxu0 0.0
    %669 = vmatprep.subr.mxu0 0.0
    %670 = vmatpush1.msra.mxu0 0.0
    %671 = vmatprep.subr.mxu0 0.0
    %672 = vmatpush1.msra.mxu0 0.0
    %673 = vmatprep.subr.mxu0 0.0
    %674 = vmatpush1.msra.mxu0 0.0
    %675 = vmatprep.subr.mxu0 0.0
    %676 = vmatpush1.msra.mxu0 0.0
    %677 = vmatprep.subr.mxu0 0.0
    %678 = vmatpush1.msra.mxu0 0.0
    %679 = vmatprep.subr.mxu0 0.0
    %680 = vmatpush1.msra.mxu0 0.0
    %681 = vmatprep.subr.mxu0 0.0
    %682 = vmatpush1.msra.mxu0 0.0
    %683 = vmatprep.subr.mxu0 0.0
    %684 = vmatpush1.msra.mxu0 0.0
    %685 = vmatprep.subr.mxu0 0.0
    %686 = vmatpush1.msra.mxu0 0.0
    %687 = vmatprep.subr.mxu0 0.0
    %688 = vmatpush1.msra.mxu0 0.0
    %689 = vmatprep.subr.mxu0 0.0
    %690 = vmatpush1.msra.mxu0 0.0
    %691 = vmatprep.subr.mxu0 0.0
    %692 = vmatpush1.msra.mxu0 0.0
    %693 = vmatprep.mubr.f32.mxu0 0.0
    %694 = vmatmul.mubr.f32.gmra.mrb[0].mxu0 %v45
    %v695 = vpop.f32.mrb[0].mxu0
    %v696 = vadd.f32 0.0, %v695
    %v697 = vpop.f32.mrb[0].mxu0
    %698 = vmatprep.mubr.f32.mxu0 0.0
    %699 = vmatmul.mubr.f32.gmra.mrb[0].mxu0 %v48
    %v700 = vpop.f32.mrb[0].mxu0
    %v701 = vadd.f32 0.0, %v700
    %v702 = vpop.f32.mrb[0].mxu0
    %703 = vmatprep.mubr.f32.mxu0 0.0
    %704 = vmatmul.mubr.f32.gmra.mrb[0].mxu0 %v51
    %v705 = vpop.f32.mrb[0].mxu0
    %v706 = vadd.f32 0.0, %v705
    %v707 = vpop.f32.mrb[0].mxu0
    %708 = vmatprep.mubr.f32.mxu0 0.0
    %709 = vmatmul.mubr.f32.gmra.mrb[0].mxu0 %v54
    %v710 = vpop.f32.mrb[0].mxu0
    %v711 = vadd.f32 0.0, %v710
    %v712 = vpop.f32.mrb[0].mxu0
    %713 = vdwg.mxu0
    %v714 = vmax.f32 %v696, 0.0
    %v715 = vmax.f32 %v701, 0.0
    %v716 = vmax.f32 %v706, 0.0
    %v717 = vmax.f32 %v711, 0.0
    %718 = vmatprep.subr.mxu0 0.0
    %719 = vmatpush1.msra.mxu0 %v430
    %720 = vmatprep.subr.mxu0 0.0
    %721 = vmatpush1.msra.mxu0 %v431
    %722 = vmatprep.subr.mxu0 0.0
    %723 = vmatpush1.msra.mxu0 %v432
    %724 = vmatprep.subr.mxu0 0.0
    %725 = vmatpush1.msra.mxu0 %v433
    %726 = vmatprep.subr.mxu0 0.0
    %727 = vmatpush1.msra.mxu0 %v519
    %728 = vmatprep.subr.mxu0 0.0
    %729 = vmatpush1.msra.mxu0 %v520
    %730 = vmatprep.subr.mxu0 0.0
    %731 = vmatpush1.msra.mxu0 %v521
    %732 = vmatprep.subr.mxu0 0.0
    %733 = vmatpush1.msra.mxu0 %v522
    %734 = vmatprep.subr.mxu0 0.0
    %735 = vmatpush1.msra.mxu0 1.0
    %736 = vmatprep.subr.mxu0 0.0
    %737 = vmatpush1.msra.mxu0 0.0
    %738 = vmatprep.subr.mxu0 0.0
    %739 = vmatpush1.msra.mxu0 0.0
    %740 = vmatprep.subr.mxu0 0.0
    %741 = vmatpush1.msra.mxu0 0.0
    %742 = vmatprep.subr.mxu0 0.0
    %743 = vmatpush1.msra.mxu0 0.0
    %744 = vmatprep.subr.mxu0 0.0
    %745 = vmatpush1.msra.mxu0 0.0
    %746 = vmatprep.subr.mxu0 0.0
    %747 = vmatpush1.msra.mxu0 0.0
    %748 = vmatprep.subr.mxu0 0.0
    %749 = vmatpush1.msra.mxu0 0.0
    %750 = vmatprep.subr.mxu0 0.0
    %751 = vmatpush1.msra.mxu0 0.0
    %752 = vmatprep.subr.mxu0 0.0
    %753 = vmatpush1.msra.mxu0 0.0
    %754 = vmatprep.subr.mxu0 0.0
    %755 = vmatpush1.msra.mxu0 0.0
    %756 = vmatprep.subr.mxu0 0.0
    %757 = vmatpush1.msra.mxu0 0.0
    %758 = vmatprep.subr.mxu0 0.0
    %759 = vmatpush1.msra.mxu0 0.0
    %760 = vmatprep.subr.mxu0 0.0
    %761 = vmatpush1.msra.mxu0 0.0
    %762 = vmatprep.subr.mxu0 0.0
    %763 = vmatpush1.msra.mxu0 0.0
    %764 = vmatprep.subr.mxu0 0.0
    %765 = vmatpush1.msra.mxu0 0.0
    %766 = vmatprep.subr.mxu0 0.0
    %767 = vmatpush1.msra.mxu0 0.0
    %768 = vmatprep.subr.mxu0 0.0
    %769 = vmatpush1.msra.mxu0 0.0
    %770 = vmatprep.subr.mxu0 0.0
    %771 = vmatpush1.msra.mxu0 0.0
    %772 = vmatprep.subr.mxu0 0.0
    %773 = vmatpush1.msra.mxu0 0.0
    %774 = vmatprep.subr.mxu0 0.0
    %775 = vmatpush1.msra.mxu0 0.0
    %776 = vmatprep.subr.mxu0 0.0
    %777 = vmatpush1.msra.mxu0 0.0
    %778 = vmatprep.subr.mxu0 0.0
    %779 = vmatpush1.msra.mxu0 0.0
    %780 = vmatprep.subr.mxu0 0.0
    %781 = vmatpush1.msra.mxu0 0.0
    %782 = vmatprep.mubr.f32.mxu0 0.0
    %783 = vmatmul.mubr.f32.gmra.mrb[0].mxu0 %v240
    %v784 = vpop.f32.mrb[0].mxu0
    %v785 = vadd.f32 0.0, %v784
    %v786 = vpop.f32.mrb[0].mxu0
    %787 = vmatprep.mubr.f32.mxu0 0.0
    %788 = vmatmul.mubr.f32.gmra.mrb[0].mxu0 %v243
    %v789 = vpop.f32.mrb[0].mxu0
    %v790 = vadd.f32 0.0, %v789
    %v791 = vpop.f32.mrb[0].mxu0
    %792 = vmatprep.mubr.f32.mxu0 0.0
    %793 = vmatmul.mubr.f32.gmra.mrb[0].mxu0 %v246
    %v794 = vpop.f32.mrb[0].mxu0
    %v795 = vadd.f32 0.0, %v794
    %v796 = vpop.f32.mrb[0].mxu0
    %797 = vmatprep.mubr.f32.mxu0 0.0
    %798 = vmatmul.mubr.f32.gmra.mrb[0].mxu0 %v249
    %v799 = vpop.f32.mrb[0].mxu0
    %v800 = vadd.f32 0.0, %v799
    %v801 = vpop.f32.mrb[0].mxu0
    %802 = vdwg.mxu0
    %v803 = vmax.f32 %v785, 0.0
    %v804 = vmax.f32 %v790, 0.0
    %v805 = vmax.f32 %v795, 0.0
    %v806 = vmax.f32 %v800, 0.0
    %807 = vmatprep.subr.mxu0 0.0
    %808 = vmatpush1.msra.mxu0 %v519
    %809 = vmatprep.subr.mxu0 0.0
    %810 = vmatpush1.msra.mxu0 %v520
    %811 = vmatprep.subr.mxu0 0.0
    %812 = vmatpush1.msra.mxu0 %v521
    %813 = vmatprep.subr.mxu0 0.0
    %814 = vmatpush1.msra.mxu0 %v522
    %815 = vmatprep.subr.mxu0 0.0
    %816 = vmatpush1.msra.mxu0 %v620
    %817 = vmatprep.subr.mxu0 0.0
    %818 = vmatpush1.msra.mxu0 %v621
    %819 = vmatprep.subr.mxu0 0.0
    %820 = vmatpush1.msra.mxu0 %v622
    %821 = vmatprep.subr.mxu0 0.0
    %822 = vmatpush1.msra.mxu0 %v623
    %823 = vmatprep.subr.mxu0 0.0
    %824 = vmatpush1.msra.mxu0 1.0
    %825 = vmatprep.subr.mxu0 0.0
    %826 = vmatpush1.msra.mxu0 0.0
    %827 = vmatprep.subr.mxu0 0.0
    %828 = vmatpush1.msra.mxu0 0.0
    %829 = vmatprep.subr.mxu0 0.0
    %830 = vmatpush1.msra.mxu0 0.0
    %831 = vmatprep.subr.mxu0 0.0
    %832 = vmatpush1.msra.mxu0 0.0
    %833 = vmatprep.subr.mxu0 0.0
    %834 = vmatpush1.msra.mxu0 0.0
    %835 = vmatprep.subr.mxu0 0.0
    %836 = vmatpush1.msra.mxu0 0.0
    %837 = vmatprep.subr.mxu0 0.0
    %838 = vmatpush1.msra.mxu0 0.0
    %839 = vmatprep.subr.mxu0 0.0
    %840 = vmatpush1.msra.mxu0 0.0
    %841 = vmatprep.subr.mxu0 0.0
    %842 = vmatpush1.msra.mxu0 0.0
    %843 = vmatprep.subr.mxu0 0.0
    %844 = vmatpush1.msra.mxu0 0.0
    %845 = vmatprep.subr.mxu0 0.0
    %846 = vmatpush1.msra.mxu0 0.0
    %847 = vmatprep.subr.mxu0 0.0
    %848 = vmatpush1.msra.mxu0 0.0
    %849 = vmatprep.subr.mxu0 0.0
    %850 = vmatpush1.msra.mxu0 0.0
    %851 = vmatprep.subr.mxu0 0.0
    %852 = vmatpush1.msra.mxu0 0.0
    %853 = vmatprep.subr.mxu0 0.0
    %854 = vmatpush1.msra.mxu0 0.0
    %855 = vmatprep.subr.mxu0 0.0
    %856 = vmatpush1.msra.mxu0 0.0
    %857 = vmatprep.subr.mxu0 0.0
    %858 = vmatpush1.msra.mxu0 0.0
    %859 = vmatprep.subr.mxu0 0.0
    %860 = vmatpush1.msra.mxu0 0.0
    %861 = vmatprep.subr.mxu0 0.0
    %862 = vmatpush1.msra.mxu0 0.0
    %863 = vmatprep.subr.mxu0 0.0
    %864 = vmatpush1.msra.mxu0 0.0
    %865 = vmatprep.subr.mxu0 0.0
    %866 = vmatpush1.msra.mxu0 0.0
    %867 = vmatprep.subr.mxu0 0.0
    %868 = vmatpush1.msra.mxu0 0.0
    %869 = vmatprep.subr.mxu0 0.0
    %870 = vmatpush1.msra.mxu0 0.0
    %871 = vmatprep.mubr.f32.mxu0 0.0
    %872 = vmatmul.mubr.f32.gmra.mrb[0].mxu0 %v524
    %v873 = vpop.f32.mrb[0].mxu0
    %v874 = vadd.f32 0.0, %v873
    %v875 = vpop.f32.mrb[0].mxu0
    %876 = vmatprep.mubr.f32.mxu0 0.0
    %877 = vmatmul.mubr.f32.gmra.mrb[0].mxu0 %v527
    %v878 = vpop.f32.mrb[0].mxu0
    %v879 = vadd.f32 0.0, %v878
    %v880 = vpop.f32.mrb[0].mxu0
    %881 = vmatprep.mubr.f32.mxu0 0.0
    %882 = vmatmul.mubr.f32.gmra.mrb[0].mxu0 %v530
    %v883 = vpop.f32.mrb[0].mxu0
    %v884 = vadd.f32 0.0, %v883
    %v885 = vpop.f32.mrb[0].mxu0
    %886 = vmatprep.mubr.f32.mxu0 0.0
    %887 = vmatmul.mubr.f32.gmra.mrb[0].mxu0 %v533
    %v888 = vpop.f32.mrb[0].mxu0
    %v889 = vadd.f32 0.0, %v888
    %v890 = vpop.f32.mrb[0].mxu0
    %891 = vdwg.mxu0
    %v892 = vmax.f32 %v874, 0.0
    %v893 = vmax.f32 %v879, 0.0
    %v894 = vmax.f32 %v884, 0.0
    %v895 = vmax.f32 %v889, 0.0
    %s896 = scalar_lea.vmem [#allocation2], 128
    %v897 = vld [vmem:[%s896] sm:$0xff]
    %v898 = vld [vmem:[%s896 + $0x8] sm:$0xff]
    %v899 = vld [vmem:[%s896 + $0x10] sm:$0xff]
    %v900 = vld [vmem:[%s896 + $0x18] sm:$0xff]
    %901 = vmatprep.subr.mxu0 0.0
    %902 = vmatpush1.msra.mxu0 %v897
    %903 = vmatprep.subr.mxu0 0.0
    %904 = vmatpush1.msra.mxu0 %v898
    %905 = vmatprep.subr.mxu0 0.0
    %906 = vmatpush1.msra.mxu0 %v899
    %907 = vmatprep.subr.mxu0 0.0
    %908 = vmatpush1.msra.mxu0 %v900
    %909 = vmatprep.subr.mxu0 0.0
    %910 = vmatpush1.msra.mxu0 %v714
    %911 = vmatprep.subr.mxu0 0.0
    %912 = vmatpush1.msra.mxu0 %v715
    %913 = vmatprep.subr.mxu0 0.0
    %914 = vmatpush1.msra.mxu0 %v716
    %915 = vmatprep.subr.mxu0 0.0
    %916 = vmatpush1.msra.mxu0 %v717
    %917 = vmatprep.subr.mxu0 0.0
    %918 = vmatpush1.msra.mxu0 1.0
    %919 = vmatprep.subr.mxu0 0.0
    %920 = vmatpush1.msra.mxu0 0.0
    %921 = vmatprep.subr.mxu0 0.0
    %922 = vmatpush1.msra.mxu0 0.0
    %923 = vmatprep.subr.mxu0 0.0
    %924 = vmatpush1.msra.mxu0 0.0
    %925 = vmatprep.subr.mxu0 0.0
    %926 = vmatpush1.msra.mxu0 0.0
    %927 = vmatprep.subr.mxu0 0.0
    %928 = vmatpush1.msra.mxu0 0.0
    %929 = vmatprep.subr.mxu0 0.0
    %930 = vmatpush1.msra.mxu0 0.0
    %931 = vmatprep.subr.mxu0 0.0
    %932 = vmatpush1.msra.mxu0 0.0
    %933 = vmatprep.subr.mxu0 0.0
    %934 = vmatpush1.msra.mxu0 0.0
    %935 = vmatprep.subr.mxu0 0.0
    %936 = vmatpush1.msra.mxu0 0.0
    %937 = vmatprep.subr.mxu0 0.0
    %938 = vmatpush1.msra.mxu0 0.0
    %939 = vmatprep.subr.mxu0 0.0
    %940 = vmatpush1.msra.mxu0 0.0
    %941 = vmatprep.subr.mxu0 0.0
    %942 = vmatpush1.msra.mxu0 0.0
    %943 = vmatprep.subr.mxu0 0.0
    %944 = vmatpush1.msra.mxu0 0.0
    %945 = vmatprep.subr.mxu0 0.0
    %946 = vmatpush1.msra.mxu0 0.0
    %947 = vmatprep.subr.mxu0 0.0
    %948 = vmatpush1.msra.mxu0 0.0
    %949 = vmatprep.subr.mxu0 0.0
    %950 = vmatpush1.msra.mxu0 0.0
    %951 = vmatprep.subr.mxu0 0.0
    %952 = vmatpush1.msra.mxu0 0.0
    %953 = vmatprep.subr.mxu0 0.0
    %954 = vmatpush1.msra.mxu0 0.0
    %955 = vmatprep.subr.mxu0 0.0
    %956 = vmatpush1.msra.mxu0 0.0
    %957 = vmatprep.subr.mxu0 0.0
    %958 = vmatpush1.msra.mxu0 0.0
    %959 = vmatprep.subr.mxu0 0.0
    %960 = vmatpush1.msra.mxu0 0.0
    %961 = vmatprep.subr.mxu0 0.0
    %962 = vmatpush1.msra.mxu0 0.0
    %963 = vmatprep.subr.mxu0 0.0
    %964 = vmatpush1.msra.mxu0 0.0
    %965 = vmatprep.mubr.f32.mxu0 0.0
    %966 = vmatmul.mubr.f32.gmra.mrb[0].mxu0 %v45
    %v967 = vpop.f32.mrb[0].mxu0
    %v968 = vadd.f32 0.0, %v967
    %v969 = vpop.f32.mrb[0].mxu0
    %970 = vmatprep.mubr.f32.mxu0 0.0
    %971 = vmatmul.mubr.f32.gmra.mrb[0].mxu0 %v48
    %v972 = vpop.f32.mrb[0].mxu0
    %v973 = vadd.f32 0.0, %v972
    %v974 = vpop.f32.mrb[0].mxu0
    %975 = vmatprep.mubr.f32.mxu0 0.0
    %976 = vmatmul.mubr.f32.gmra.mrb[0].mxu0 %v51
    %v977 = vpop.f32.mrb[0].mxu0
    %v978 = vadd.f32 0.0, %v977
    %v979 = vpop.f32.mrb[0].mxu0
    %980 = vmatprep.mubr.f32.mxu0 0.0
    %981 = vmatmul.mubr.f32.gmra.mrb[0].mxu0 %v54
    %v982 = vpop.f32.mrb[0].mxu0
    %v983 = vadd.f32 0.0, %v982
    %v984 = vpop.f32.mrb[0].mxu0
    %985 = vdwg.mxu0
    %v986 = vmax.f32 %v968, 0.0
    %v987 = vmax.f32 %v973, 0.0
    %v988 = vmax.f32 %v978, 0.0
    %v989 = vmax.f32 %v983, 0.0
    %990 = vmatprep.subr.mxu0 0.0
    %991 = vmatpush1.msra.mxu0 %v714
    %992 = vmatprep.subr.mxu0 0.0
    %993 = vmatpush1.msra.mxu0 %v715
    %994 = vmatprep.subr.mxu0 0.0
    %995 = vmatpush1.msra.mxu0 %v716
    %996 = vmatprep.subr.mxu0 0.0
    %997 = vmatpush1.msra.mxu0 %v717
    %998 = vmatprep.subr.mxu0 0.0
    %999 = vmatpush1.msra.mxu0 %v803
    %1000 = vmatprep.subr.mxu0 0.0
    %1001 = vmatpush1.msra.mxu0 %v804
    %1002 = vmatprep.subr.mxu0 0.0
    %1003 = vmatpush1.msra.mxu0 %v805
    %1004 = vmatprep.subr.mxu0 0.0
    %1005 = vmatpush1.msra.mxu0 %v806
    %1006 = vmatprep.subr.mxu0 0.0
    %1007 = vmatpush1.msra.mxu0 1.0
    %1008 = vmatprep.subr.mxu0 0.0
    %1009 = vmatpush1.msra.mxu0 0.0
    %1010 = vmatprep.subr.mxu0 0.0
    %1011 = vmatpush1.msra.mxu0 0.0
    %1012 = vmatprep.subr.mxu0 0.0
    %1013 = vmatpush1.msra.mxu0 0.0
    %1014 = vmatprep.subr.mxu0 0.0
    %1015 = vmatpush1.msra.mxu0 0.0
    %1016 = vmatprep.subr.mxu0 0.0
    %1017 = vmatpush1.msra.mxu0 0.0
    %1018 = vmatprep.subr.mxu0 0.0
    %1019 = vmatpush1.msra.mxu0 0.0
    %1020 = vmatprep.subr.mxu0 0.0
    %1021 = vmatpush1.msra.mxu0 0.0
    %1022 = vmatprep.subr.mxu0 0.0
    %1023 = vmatpush1.msra.mxu0 0.0
    %1024 = vmatprep.subr.mxu0 0.0
    %1025 = vmatpush1.msra.mxu0 0.0
    %1026 = vmatprep.subr.mxu0 0.0
    %1027 = vmatpush1.msra.mxu0 0.0
    %1028 = vmatprep.subr.mxu0 0.0
    %1029 = vmatpush1.msra.mxu0 0.0
    %1030 = vmatprep.subr.mxu0 0.0
    %1031 = vmatpush1.msra.mxu0 0.0
    %1032 = vmatprep.subr.mxu0 0.0
    %1033 = vmatpush1.msra.mxu0 0.0
    %1034 = vmatprep.subr.mxu0 0.0
    %1035 = vmatpush1.msra.mxu0 0.0
    %1036 = vmatprep.subr.mxu0 0.0
    %1037 = vmatpush1.msra.mxu0 0.0
    %1038 = vmatprep.subr.mxu0 0.0
    %1039 = vmatpush1.msra.mxu0 0.0
    %1040 = vmatprep.subr.mxu0 0.0
    %1041 = vmatpush1.msra.mxu0 0.0
    %1042 = vmatprep.subr.mxu0 0.0
    %1043 = vmatpush1.msra.mxu0 0.0
    %1044 = vmatprep.subr.mxu0 0.0
    %1045 = vmatpush1.msra.mxu0 0.0
    %1046 = vmatprep.subr.mxu0 0.0
    %1047 = vmatpush1.msra.mxu0 0.0
    %1048 = vmatprep.subr.mxu0 0.0
    %1049 = vmatpush1.msra.mxu0 0.0
    %1050 = vmatprep.subr.mxu0 0.0
    %1051 = vmatpush1.msra.mxu0 0.0
    %1052 = vmatprep.subr.mxu0 0.0
    %1053 = vmatpush1.msra.mxu0 0.0
    %1054 = vmatprep.mubr.f32.mxu0 0.0
    %1055 = vmatmul.mubr.f32.gmra.mrb[0].mxu0 %v240
    %v1056 = vpop.f32.mrb[0].mxu0
    %v1057 = vadd.f32 0.0, %v1056
    %v1058 = vpop.f32.mrb[0].mxu0
    %1059 = vmatprep.mubr.f32.mxu0 0.0
    %1060 = vmatmul.mubr.f32.gmra.mrb[0].mxu0 %v243
    %v1061 = vpop.f32.mrb[0].mxu0
    %v1062 = vadd.f32 0.0, %v1061
    %v1063 = vpop.f32.mrb[0].mxu0
    %1064 = vmatprep.mubr.f32.mxu0 0.0
    %1065 = vmatmul.mubr.f32.gmra.mrb[0].mxu0 %v246
    %v1066 = vpop.f32.mrb[0].mxu0
    %v1067 = vadd.f32 0.0, %v1066
    %v1068 = vpop.f32.mrb[0].mxu0
    %1069 = vmatprep.mubr.f32.mxu0 0.0
    %1070 = vmatmul.mubr.f32.gmra.mrb[0].mxu0 %v249
    %v1071 = vpop.f32.mrb[0].mxu0
    %v1072 = vadd.f32 0.0, %v1071
    %v1073 = vpop.f32.mrb[0].mxu0
    %1074 = vdwg.mxu0
    %v1075 = vmax.f32 %v1057, 0.0
    %v1076 = vmax.f32 %v1062, 0.0
    %v1077 = vmax.f32 %v1067, 0.0
    %v1078 = vmax.f32 %v1072, 0.0
    %1079 = vmatprep.subr.mxu0 0.0
    %1080 = vmatpush1.msra.mxu0 %v803
    %1081 = vmatprep.subr.mxu0 0.0
    %1082 = vmatpush1.msra.mxu0 %v804
    %1083 = vmatprep.subr.mxu0 0.0
    %1084 = vmatpush1.msra.mxu0 %v805
    %1085 = vmatprep.subr.mxu0 0.0
    %1086 = vmatpush1.msra.mxu0 %v806
    %1087 = vmatprep.subr.mxu0 0.0
    %1088 = vmatpush1.msra.mxu0 %v892
    %1089 = vmatprep.subr.mxu0 0.0
    %1090 = vmatpush1.msra.mxu0 %v893
    %1091 = vmatprep.subr.mxu0 0.0
    %1092 = vmatpush1.msra.mxu0 %v894
    %1093 = vmatprep.subr.mxu0 0.0
    %1094 = vmatpush1.msra.mxu0 %v895
    %1095 = vmatprep.subr.mxu0 0.0
    %1096 = vmatpush1.msra.mxu0 1.0
    %1097 = vmatprep.subr.mxu0 0.0
    %1098 = vmatpush1.msra.mxu0 0.0
    %1099 = vmatprep.subr.mxu0 0.0
    %1100 = vmatpush1.msra.mxu0 0.0
    %1101 = vmatprep.subr.mxu0 0.0
    %1102 = vmatpush1.msra.mxu0 0.0
    %1103 = vmatprep.subr.mxu0 0.0
    %1104 = vmatpush1.msra.mxu0 0.0
    %1105 = vmatprep.subr.mxu0 0.0
    %1106 = vmatpush1.msra.mxu0 0.0
    %1107 = vmatprep.subr.mxu0 0.0
    %1108 = vmatpush1.msra.mxu0 0.0
    %1109 = vmatprep.subr.mxu0 0.0
    %1110 = vmatpush1.msra.mxu0 0.0
    %1111 = vmatprep.subr.mxu0 0.0
    %1112 = vmatpush1.msra.mxu0 0.0
    %1113 = vmatprep.subr.mxu0 0.0
    %1114 = vmatpush1.msra.mxu0 0.0
    %1115 = vmatprep.subr.mxu0 0.0
    %1116 = vmatpush1.msra.mxu0 0.0
    %1117 = vmatprep.subr.mxu0 0.0
    %1118 = vmatpush1.msra.mxu0 0.0
    %1119 = vmatprep.subr.mxu0 0.0
    %1120 = vmatpush1.msra.mxu0 0.0
    %1121 = vmatprep.subr.mxu0 0.0
    %1122 = vmatpush1.msra.mxu0 0.0
    %1123 = vmatprep.subr.mxu0 0.0
    %1124 = vmatpush1.msra.mxu0 0.0
    %1125 = vmatprep.subr.mxu0 0.0
    %1126 = vmatpush1.msra.mxu0 0.0
    %1127 = vmatprep.subr.mxu0 0.0
    %1128 = vmatpush1.msra.mxu0 0.0
    %1129 = vmatprep.subr.mxu0 0.0
    %1130 = vmatpush1.msra.mxu0 0.0
    %1131 = vmatprep.subr.mxu0 0.0
    %1132 = vmatpush1.msra.mxu0 0.0
    %1133 = vmatprep.subr.mxu0 0.0
    %1134 = vmatpush1.msra.mxu0 0.0
    %1135 = vmatprep.subr.mxu0 0.0
    %1136 = vmatpush1.msra.mxu0 0.0
    %1137 = vmatprep.subr.mxu0 0.0
    %1138 = vmatpush1.msra.mxu0 0.0
    %1139 = vmatprep.subr.mxu0 0.0
    %1140 = vmatpush1.msra.mxu0 0.0
    %1141 = vmatprep.subr.mxu0 0.0
    %1142 = vmatpush1.msra.mxu0 0.0
    %1143 = vmatprep.mubr.f32.mxu0 0.0
    %1144 = vmatmul.mubr.f32.gmra.mrb[0].mxu0 %v524
    %v1145 = vpop.f32.mrb[0].mxu0
    %v1146 = vadd.f32 0.0, %v1145
    %v1147 = vpop.f32.mrb[0].mxu0
    %1148 = vmatprep.mubr.f32.mxu0 0.0
    %1149 = vmatmul.mubr.f32.gmra.mrb[0].mxu0 %v527
    %v1150 = vpop.f32.mrb[0].mxu0
    %v1151 = vadd.f32 0.0, %v1150
    %v1152 = vpop.f32.mrb[0].mxu0
    %1153 = vmatprep.mubr.f32.mxu0 0.0
    %1154 = vmatmul.mubr.f32.gmra.mrb[0].mxu0 %v530
    %v1155 = vpop.f32.mrb[0].mxu0
    %v1156 = vadd.f32 0.0, %v1155
    %v1157 = vpop.f32.mrb[0].mxu0
    %1158 = vmatprep.mubr.f32.mxu0 0.0
    %1159 = vmatmul.mubr.f32.gmra.mrb[0].mxu0 %v533
    %v1160 = vpop.f32.mrb[0].mxu0
    %v1161 = vadd.f32 0.0, %v1160
    %v1162 = vpop.f32.mrb[0].mxu0
    %1163 = vdwg.mxu0
    %v1164 = vmax.f32 %v1146, 0.0
    %v1165 = vmax.f32 %v1151, 0.0
    %v1166 = vmax.f32 %v1156, 0.0
    %v1167 = vmax.f32 %v1161, 0.0
    %s1168 = scalar_lea.vmem [#allocation2], 160
    %v1169 = vld [vmem:[%s1168] sm:$0xff]
    %v1170 = vld [vmem:[%s1168 + $0x8] sm:$0xff]
    %v1171 = vld [vmem:[%s1168 + $0x10] sm:$0xff]
    %v1172 = vld [vmem:[%s1168 + $0x18] sm:$0xff]
    %1173 = vmatprep.subr.mxu0 0.0
    %1174 = vmatpush1.msra.mxu0 %v1169
    %1175 = vmatprep.subr.mxu0 0.0
    %1176 = vmatpush1.msra.mxu0 %v1170
    %1177 = vmatprep.subr.mxu0 0.0
    %1178 = vmatpush1.msra.mxu0 %v1171
    %1179 = vmatprep.subr.mxu0 0.0
    %1180 = vmatpush1.msra.mxu0 %v1172
    %1181 = vmatprep.subr.mxu0 0.0
    %1182 = vmatpush1.msra.mxu0 %v986
    %1183 = vmatprep.subr.mxu0 0.0
    %1184 = vmatpush1.msra.mxu0 %v987
    %1185 = vmatprep.subr.mxu0 0.0
    %1186 = vmatpush1.msra.mxu0 %v988
    %1187 = vmatprep.subr.mxu0 0.0
    %1188 = vmatpush1.msra.mxu0 %v989
    %1189 = vmatprep.subr.mxu0 0.0
    %1190 = vmatpush1.msra.mxu0 1.0
    %1191 = vmatprep.subr.mxu0 0.0
    %1192 = vmatpush1.msra.mxu0 0.0
    %1193 = vmatprep.subr.mxu0 0.0
    %1194 = vmatpush1.msra.mxu0 0.0
    %1195 = vmatprep.subr.mxu0 0.0
    %1196 = vmatpush1.msra.mxu0 0.0
    %1197 = vmatprep.subr.mxu0 0.0
    %1198 = vmatpush1.msra.mxu0 0.0
    %1199 = vmatprep.subr.mxu0 0.0
    %1200 = vmatpush1.msra.mxu0 0.0
    %1201 = vmatprep.subr.mxu0 0.0
    %1202 = vmatpush1.msra.mxu0 0.0
    %1203 = vmatprep.subr.mxu0 0.0
    %1204 = vmatpush1.msra.mxu0 0.0
    %1205 = vmatprep.subr.mxu0 0.0
    %1206 = vmatpush1.msra.mxu0 0.0
    %1207 = vmatprep.subr.mxu0 0.0
    %1208 = vmatpush1.msra.mxu0 0.0
    %1209 = vmatprep.subr.mxu0 0.0
    %1210 = vmatpush1.msra.mxu0 0.0
    %1211 = vmatprep.subr.mxu0 0.0
    %1212 = vmatpush1.msra.mxu0 0.0
    %1213 = vmatprep.subr.mxu0 0.0
    %1214 = vmatpush1.msra.mxu0 0.0
    %1215 = vmatprep.subr.mxu0 0.0
    %1216 = vmatpush1.msra.mxu0 0.0
    %1217 = vmatprep.subr.mxu0 0.0
    %1218 = vmatpush1.msra.mxu0 0.0
    %1219 = vmatprep.subr.mxu0 0.0
    %1220 = vmatpush1.msra.mxu0 0.0
    %1221 = vmatprep.subr.mxu0 0.0
    %1222 = vmatpush1.msra.mxu0 0.0
    %1223 = vmatprep.subr.mxu0 0.0
    %1224 = vmatpush1.msra.mxu0 0.0
    %1225 = vmatprep.subr.mxu0 0.0
    %1226 = vmatpush1.msra.mxu0 0.0
    %1227 = vmatprep.subr.mxu0 0.0
    %1228 = vmatpush1.msra.mxu0 0.0
    %1229 = vmatprep.subr.mxu0 0.0
    %1230 = vmatpush1.msra.mxu0 0.0
    %1231 = vmatprep.subr.mxu0 0.0
    %1232 = vmatpush1.msra.mxu0 0.0
    %1233 = vmatprep.subr.mxu0 0.0
    %1234 = vmatpush1.msra.mxu0 0.0
    %1235 = vmatprep.subr.mxu0 0.0
    %1236 = vmatpush1.msra.mxu0 0.0
    %1237 = vmatprep.mubr.f32.mxu0 0.0
    %1238 = vmatmul.mubr.f32.gmra.mrb[0].mxu0 %v45
    %v1239 = vpop.f32.mrb[0].mxu0
    %v1240 = vadd.f32 0.0, %v1239
    %v1241 = vpop.f32.mrb[0].mxu0
    %1242 = vmatprep.mubr.f32.mxu0 0.0
    %1243 = vmatmul.mubr.f32.gmra.mrb[0].mxu0 %v48
    %v1244 = vpop.f32.mrb[0].mxu0
    %v1245 = vadd.f32 0.0, %v1244
    %v1246 = vpop.f32.mrb[0].mxu0
    %1247 = vmatprep.mubr.f32.mxu0 0.0
    %1248 = vmatmul.mubr.f32.gmra.mrb[0].mxu0 %v51
    %v1249 = vpop.f32.mrb[0].mxu0
    %v1250 = vadd.f32 0.0, %v1249
    %v1251 = vpop.f32.mrb[0].mxu0
    %1252 = vmatprep.mubr.f32.mxu0 0.0
    %1253 = vmatmul.mubr.f32.gmra.mrb[0].mxu0 %v54
    %v1254 = vpop.f32.mrb[0].mxu0
    %v1255 = vadd.f32 0.0, %v1254
    %v1256 = vpop.f32.mrb[0].mxu0
    %1257 = vdwg.mxu0
    %v1258 = vmax.f32 %v1240, 0.0
    %v1259 = vmax.f32 %v1245, 0.0
    %v1260 = vmax.f32 %v1250, 0.0
    %v1261 = vmax.f32 %v1255, 0.0
    %1262 = vmatprep.subr.mxu0 0.0
    %1263 = vmatpush1.msra.mxu0 %v986
    %1264 = vmatprep.subr.mxu0 0.0
    %1265 = vmatpush1.msra.mxu0 %v987
    %1266 = vmatprep.subr.mxu0 0.0
    %1267 = vmatpush1.msra.mxu0 %v988
    %1268 = vmatprep.subr.mxu0 0.0
    %1269 = vmatpush1.msra.mxu0 %v989
    %1270 = vmatprep.subr.mxu0 0.0
    %1271 = vmatpush1.msra.mxu0 %v1075
    %1272 = vmatprep.subr.mxu0 0.0
    %1273 = vmatpush1.msra.mxu0 %v1076
    %1274 = vmatprep.subr.mxu0 0.0
    %1275 = vmatpush1.msra.mxu0 %v1077
    %1276 = vmatprep.subr.mxu0 0.0
    %1277 = vmatpush1.msra.mxu0 %v1078
    %1278 = vmatprep.subr.mxu0 0.0
    %1279 = vmatpush1.msra.mxu0 1.0
    %1280 = vmatprep.subr.mxu0 0.0
    %1281 = vmatpush1.msra.mxu0 0.0
    %1282 = vmatprep.subr.mxu0 0.0
    %1283 = vmatpush1.msra.mxu0 0.0
    %1284 = vmatprep.subr.mxu0 0.0
    %1285 = vmatpush1.msra.mxu0 0.0
    %1286 = vmatprep.subr.mxu0 0.0
    %1287 = vmatpush1.msra.mxu0 0.0
    %1288 = vmatprep.subr.mxu0 0.0
    %1289 = vmatpush1.msra.mxu0 0.0
    %1290 = vmatprep.subr.mxu0 0.0
    %1291 = vmatpush1.msra.mxu0 0.0
    %1292 = vmatprep.subr.mxu0 0.0
    %1293 = vmatpush1.msra.mxu0 0.0
    %1294 = vmatprep.subr.mxu0 0.0
    %1295 = vmatpush1.msra.mxu0 0.0
    %1296 = vmatprep.subr.mxu0 0.0
    %1297 = vmatpush1.msra.mxu0 0.0
    %1298 = vmatprep.subr.mxu0 0.0
    %1299 = vmatpush1.msra.mxu0 0.0
    %1300 = vmatprep.subr.mxu0 0.0
    %1301 = vmatpush1.msra.mxu0 0.0
    %1302 = vmatprep.subr.mxu0 0.0
    %1303 = vmatpush1.msra.mxu0 0.0
    %1304 = vmatprep.subr.mxu0 0.0
    %1305 = vmatpush1.msra.mxu0 0.0
    %1306 = vmatprep.subr.mxu0 0.0
    %1307 = vmatpush1.msra.mxu0 0.0
    %1308 = vmatprep.subr.mxu0 0.0
    %1309 = vmatpush1.msra.mxu0 0.0
    %1310 = vmatprep.subr.mxu0 0.0
    %1311 = vmatpush1.msra.mxu0 0.0
    %1312 = vmatprep.subr.mxu0 0.0
    %1313 = vmatpush1.msra.mxu0 0.0
    %1314 = vmatprep.subr.mxu0 0.0
    %1315 = vmatpush1.msra.mxu0 0.0
    %1316 = vmatprep.subr.mxu0 0.0
    %1317 = vmatpush1.msra.mxu0 0.0
    %1318 = vmatprep.subr.mxu0 0.0
    %1319 = vmatpush1.msra.mxu0 0.0
    %1320 = vmatprep.subr.mxu0 0.0
    %1321 = vmatpush1.msra.mxu0 0.0
    %1322 = vmatprep.subr.mxu0 0.0
    %1323 = vmatpush1.msra.mxu0 0.0
    %1324 = vmatprep.subr.mxu0 0.0
    %1325 = vmatpush1.msra.mxu0 0.0
    %1326 = vmatprep.mubr.f32.mxu0 0.0
    %1327 = vmatmul.mubr.f32.gmra.mrb[0].mxu0 %v240
    %v1328 = vpop.f32.mrb[0].mxu0
    %v1329 = vadd.f32 0.0, %v1328
    %v1330 = vpop.f32.mrb[0].mxu0
    %1331 = vmatprep.mubr.f32.mxu0 0.0
    %1332 = vmatmul.mubr.f32.gmra.mrb[0].mxu0 %v243
    %v1333 = vpop.f32.mrb[0].mxu0
    %v1334 = vadd.f32 0.0, %v1333
    %v1335 = vpop.f32.mrb[0].mxu0
    %1336 = vmatprep.mubr.f32.mxu0 0.0
    %1337 = vmatmul.mubr.f32.gmra.mrb[0].mxu0 %v246
    %v1338 = vpop.f32.mrb[0].mxu0
    %v1339 = vadd.f32 0.0, %v1338
    %v1340 = vpop.f32.mrb[0].mxu0
    %1341 = vmatprep.mubr.f32.mxu0 0.0
    %1342 = vmatmul.mubr.f32.gmra.mrb[0].mxu0 %v249
    %v1343 = vpop.f32.mrb[0].mxu0
    %v1344 = vadd.f32 0.0, %v1343
    %v1345 = vpop.f32.mrb[0].mxu0
    %1346 = vdwg.mxu0
    %v1347 = vmax.f32 %v1329, 0.0
    %v1348 = vmax.f32 %v1334, 0.0
    %v1349 = vmax.f32 %v1339, 0.0
    %v1350 = vmax.f32 %v1344, 0.0
    %1351 = vmatprep.subr.mxu0 0.0
    %1352 = vmatpush1.msra.mxu0 %v1075
    %1353 = vmatprep.subr.mxu0 0.0
    %1354 = vmatpush1.msra.mxu0 %v1076
    %1355 = vmatprep.subr.mxu0 0.0
    %1356 = vmatpush1.msra.mxu0 %v1077
    %1357 = vmatprep.subr.mxu0 0.0
    %1358 = vmatpush1.msra.mxu0 %v1078
    %1359 = vmatprep.subr.mxu0 0.0
    %1360 = vmatpush1.msra.mxu0 %v1164
    %1361 = vmatprep.subr.mxu0 0.0
    %1362 = vmatpush1.msra.mxu0 %v1165
    %1363 = vmatprep.subr.mxu0 0.0
    %1364 = vmatpush1.msra.mxu0 %v1166
    %1365 = vmatprep.subr.mxu0 0.0
    %1366 = vmatpush1.msra.mxu0 %v1167
    %1367 = vmatprep.subr.mxu0 0.0
    %1368 = vmatpush1.msra.mxu0 1.0
    %1369 = vmatprep.subr.mxu0 0.0
    %1370 = vmatpush1.msra.mxu0 0.0
    %1371 = vmatprep.subr.mxu0 0.0
    %1372 = vmatpush1.msra.mxu0 0.0
    %1373 = vmatprep.subr.mxu0 0.0
    %1374 = vmatpush1.msra.mxu0 0.0
    %1375 = vmatprep.subr.mxu0 0.0
    %1376 = vmatpush1.msra.mxu0 0.0
    %1377 = vmatprep.subr.mxu0 0.0
    %1378 = vmatpush1.msra.mxu0 0.0
    %1379 = vmatprep.subr.mxu0 0.0
    %1380 = vmatpush1.msra.mxu0 0.0
    %1381 = vmatprep.subr.mxu0 0.0
    %1382 = vmatpush1.msra.mxu0 0.0
    %1383 = vmatprep.subr.mxu0 0.0
    %1384 = vmatpush1.msra.mxu0 0.0
    %1385 = vmatprep.subr.mxu0 0.0
    %1386 = vmatpush1.msra.mxu0 0.0
    %1387 = vmatprep.subr.mxu0 0.0
    %1388 = vmatpush1.msra.mxu0 0.0
    %1389 = vmatprep.subr.mxu0 0.0
    %1390 = vmatpush1.msra.mxu0 0.0
    %1391 = vmatprep.subr.mxu0 0.0
    %1392 = vmatpush1.msra.mxu0 0.0
    %1393 = vmatprep.subr.mxu0 0.0
    %1394 = vmatpush1.msra.mxu0 0.0
    %1395 = vmatprep.subr.mxu0 0.0
    %1396 = vmatpush1.msra.mxu0 0.0
    %1397 = vmatprep.subr.mxu0 0.0
    %1398 = vmatpush1.msra.mxu0 0.0
    %1399 = vmatprep.subr.mxu0 0.0
    %1400 = vmatpush1.msra.mxu0 0.0
    %1401 = vmatprep.subr.mxu0 0.0
    %1402 = vmatpush1.msra.mxu0 0.0
    %1403 = vmatprep.subr.mxu0 0.0
    %1404 = vmatpush1.msra.mxu0 0.0
    %1405 = vmatprep.subr.mxu0 0.0
    %1406 = vmatpush1.msra.mxu0 0.0
    %1407 = vmatprep.subr.mxu0 0.0
    %1408 = vmatpush1.msra.mxu0 0.0
    %1409 = vmatprep.subr.mxu0 0.0
    %1410 = vmatpush1.msra.mxu0 0.0
    %1411 = vmatprep.subr.mxu0 0.0
    %1412 = vmatpush1.msra.mxu0 0.0
    %1413 = vmatprep.subr.mxu0 0.0
    %1414 = vmatpush1.msra.mxu0 0.0
    %1415 = vmatprep.mubr.f32.mxu0 0.0
    %1416 = vmatmul.mubr.f32.gmra.mrb[0].mxu0 %v524
    %v1417 = vpop.f32.mrb[0].mxu0
    %v1418 = vadd.f32 0.0, %v1417
    %v1419 = vpop.f32.mrb[0].mxu0
    %1420 = vmatprep.mubr.f32.mxu0 0.0
    %1421 = vmatmul.mubr.f32.gmra.mrb[0].mxu0 %v527
    %v1422 = vpop.f32.mrb[0].mxu0
    %v1423 = vadd.f32 0.0, %v1422
    %v1424 = vpop.f32.mrb[0].mxu0
    %1425 = vmatprep.mubr.f32.mxu0 0.0
    %1426 = vmatmul.mubr.f32.gmra.mrb[0].mxu0 %v530
    %v1427 = vpop.f32.mrb[0].mxu0
    %v1428 = vadd.f32 0.0, %v1427
    %v1429 = vpop.f32.mrb[0].mxu0
    %1430 = vmatprep.mubr.f32.mxu0 0.0
    %1431 = vmatmul.mubr.f32.gmra.mrb[0].mxu0 %v533
    %v1432 = vpop.f32.mrb[0].mxu0
    %v1433 = vadd.f32 0.0, %v1432
    %v1434 = vpop.f32.mrb[0].mxu0
    %1435 = vdwg.mxu0
    %v1436 = vmax.f32 %v1418, 0.0
    %v1437 = vmax.f32 %v1423, 0.0
    %v1438 = vmax.f32 %v1428, 0.0
    %v1439 = vmax.f32 %v1433, 0.0
    %s1440 = scalar_lea.vmem [#allocation2], 192
    %v1441 = vld [vmem:[%s1440] sm:$0xff]
    %v1442 = vld [vmem:[%s1440 + $0x8] sm:$0xff]
    %v1443 = vld [vmem:[%s1440 + $0x10] sm:$0xff]
    %v1444 = vld [vmem:[%s1440 + $0x18] sm:$0xff]
    %1445 = vmatprep.subr.mxu0 0.0
    %1446 = vmatpush1.msra.mxu0 %v1441
    %1447 = vmatprep.subr.mxu0 0.0
    %1448 = vmatpush1.msra.mxu0 %v1442
    %1449 = vmatprep.subr.mxu0 0.0
    %1450 = vmatpush1.msra.mxu0 %v1443
    %1451 = vmatprep.subr.mxu0 0.0
    %1452 = vmatpush1.msra.mxu0 %v1444
    %1453 = vmatprep.subr.mxu0 0.0
    %1454 = vmatpush1.msra.mxu0 %v1258
    %1455 = vmatprep.subr.mxu0 0.0
    %1456 = vmatpush1.msra.mxu0 %v1259
    %1457 = vmatprep.subr.mxu0 0.0
    %1458 = vmatpush1.msra.mxu0 %v1260
    %1459 = vmatprep.subr.mxu0 0.0
    %1460 = vmatpush1.msra.mxu0 %v1261
    %1461 = vmatprep.subr.mxu0 0.0
    %1462 = vmatpush1.msra.mxu0 1.0
    %1463 = vmatprep.subr.mxu0 0.0
    %1464 = vmatpush1.msra.mxu0 0.0
    %1465 = vmatprep.subr.mxu0 0.0
    %1466 = vmatpush1.msra.mxu0 0.0
    %1467 = vmatprep.subr.mxu0 0.0
    %1468 = vmatpush1.msra.mxu0 0.0
    %1469 = vmatprep.subr.mxu0 0.0
    %1470 = vmatpush1.msra.mxu0 0.0
    %1471 = vmatprep.subr.mxu0 0.0
    %1472 = vmatpush1.msra.mxu0 0.0
    %1473 = vmatprep.subr.mxu0 0.0
    %1474 = vmatpush1.msra.mxu0 0.0
    %1475 = vmatprep.subr.mxu0 0.0
    %1476 = vmatpush1.msra.mxu0 0.0
    %1477 = vmatprep.subr.mxu0 0.0
    %1478 = vmatpush1.msra.mxu0 0.0
    %1479 = vmatprep.subr.mxu0 0.0
    %1480 = vmatpush1.msra.mxu0 0.0
    %1481 = vmatprep.subr.mxu0 0.0
    %1482 = vmatpush1.msra.mxu0 0.0
    %1483 = vmatprep.subr.mxu0 0.0
    %1484 = vmatpush1.msra.mxu0 0.0
    %1485 = vmatprep.subr.mxu0 0.0
    %1486 = vmatpush1.msra.mxu0 0.0
    %1487 = vmatprep.subr.mxu0 0.0
    %1488 = vmatpush1.msra.mxu0 0.0
    %1489 = vmatprep.subr.mxu0 0.0
    %1490 = vmatpush1.msra.mxu0 0.0
    %1491 = vmatprep.subr.mxu0 0.0
    %1492 = vmatpush1.msra.mxu0 0.0
    %1493 = vmatprep.subr.mxu0 0.0
    %1494 = vmatpush1.msra.mxu0 0.0
    %1495 = vmatprep.subr.mxu0 0.0
    %1496 = vmatpush1.msra.mxu0 0.0
    %1497 = vmatprep.subr.mxu0 0.0
    %1498 = vmatpush1.msra.mxu0 0.0
    %1499 = vmatprep.subr.mxu0 0.0
    %1500 = vmatpush1.msra.mxu0 0.0
    %1501 = vmatprep.subr.mxu0 0.0
    %1502 = vmatpush1.msra.mxu0 0.0
    %1503 = vmatprep.subr.mxu0 0.0
    %1504 = vmatpush1.msra.mxu0 0.0
    %1505 = vmatprep.subr.mxu0 0.0
    %1506 = vmatpush1.msra.mxu0 0.0
    %1507 = vmatprep.subr.mxu0 0.0
    %1508 = vmatpush1.msra.mxu0 0.0
    %1509 = vmatprep.mubr.f32.mxu0 0.0
    %1510 = vmatmul.mubr.f32.gmra.mrb[0].mxu0 %v45
    %v1511 = vpop.f32.mrb[0].mxu0
    %v1512 = vadd.f32 0.0, %v1511
    %v1513 = vpop.f32.mrb[0].mxu0
    %1514 = vmatprep.mubr.f32.mxu0 0.0
    %1515 = vmatmul.mubr.f32.gmra.mrb[0].mxu0 %v48
    %v1516 = vpop.f32.mrb[0].mxu0
    %v1517 = vadd.f32 0.0, %v1516
    %v1518 = vpop.f32.mrb[0].mxu0
    %1519 = vmatprep.mubr.f32.mxu0 0.0
    %1520 = vmatmul.mubr.f32.gmra.mrb[0].mxu0 %v51
    %v1521 = vpop.f32.mrb[0].mxu0
    %v1522 = vadd.f32 0.0, %v1521
    %v1523 = vpop.f32.mrb[0].mxu0
    %1524 = vmatprep.mubr.f32.mxu0 0.0
    %1525 = vmatmul.mubr.f32.gmra.mrb[0].mxu0 %v54
    %v1526 = vpop.f32.mrb[0].mxu0
    %v1527 = vadd.f32 0.0, %v1526
    %v1528 = vpop.f32.mrb[0].mxu0
    %1529 = vdwg.mxu0
    %v1530 = vmax.f32 %v1512, 0.0
    %v1531 = vmax.f32 %v1517, 0.0
    %v1532 = vmax.f32 %v1522, 0.0
    %v1533 = vmax.f32 %v1527, 0.0
    %1534 = vmatprep.subr.mxu0 0.0
    %1535 = vmatpush1.msra.mxu0 %v1258
    %1536 = vmatprep.subr.mxu0 0.0
    %1537 = vmatpush1.msra.mxu0 %v1259
    %1538 = vmatprep.subr.mxu0 0.0
    %1539 = vmatpush1.msra.mxu0 %v1260
    %1540 = vmatprep.subr.mxu0 0.0
    %1541 = vmatpush1.msra.mxu0 %v1261
    %1542 = vmatprep.subr.mxu0 0.0
    %1543 = vmatpush1.msra.mxu0 %v1347
    %1544 = vmatprep.subr.mxu0 0.0
    %1545 = vmatpush1.msra.mxu0 %v1348
    %1546 = vmatprep.subr.mxu0 0.0
    %1547 = vmatpush1.msra.mxu0 %v1349
    %1548 = vmatprep.subr.mxu0 0.0
    %1549 = vmatpush1.msra.mxu0 %v1350
    %1550 = vmatprep.subr.mxu0 0.0
    %1551 = vmatpush1.msra.mxu0 1.0
    %1552 = vmatprep.subr.mxu0 0.0
    %1553 = vmatpush1.msra.mxu0 0.0
    %1554 = vmatprep.subr.mxu0 0.0
    %1555 = vmatpush1.msra.mxu0 0.0
    %1556 = vmatprep.subr.mxu0 0.0
    %1557 = vmatpush1.msra.mxu0 0.0
    %1558 = vmatprep.subr.mxu0 0.0
    %1559 = vmatpush1.msra.mxu0 0.0
    %1560 = vmatprep.subr.mxu0 0.0
    %1561 = vmatpush1.msra.mxu0 0.0
    %1562 = vmatprep.subr.mxu0 0.0
    %1563 = vmatpush1.msra.mxu0 0.0
    %1564 = vmatprep.subr.mxu0 0.0
    %1565 = vmatpush1.msra.mxu0 0.0
    %1566 = vmatprep.subr.mxu0 0.0
    %1567 = vmatpush1.msra.mxu0 0.0
    %1568 = vmatprep.subr.mxu0 0.0
    %1569 = vmatpush1.msra.mxu0 0.0
    %1570 = vmatprep.subr.mxu0 0.0
    %1571 = vmatpush1.msra.mxu0 0.0
    %1572 = vmatprep.subr.mxu0 0.0
    %1573 = vmatpush1.msra.mxu0 0.0
    %1574 = vmatprep.subr.mxu0 0.0
    %1575 = vmatpush1.msra.mxu0 0.0
    %1576 = vmatprep.subr.mxu0 0.0
    %1577 = vmatpush1.msra.mxu0 0.0
    %1578 = vmatprep.subr.mxu0 0.0
    %1579 = vmatpush1.msra.mxu0 0.0
    %1580 = vmatprep.subr.mxu0 0.0
    %1581 = vmatpush1.msra.mxu0 0.0
    %1582 = vmatprep.subr.mxu0 0.0
    %1583 = vmatpush1.msra.mxu0 0.0
    %1584 = vmatprep.subr.mxu0 0.0
    %1585 = vmatpush1.msra.mxu0 0.0
    %1586 = vmatprep.subr.mxu0 0.0
    %1587 = vmatpush1.msra.mxu0 0.0
    %1588 = vmatprep.subr.mxu0 0.0
    %1589 = vmatpush1.msra.mxu0 0.0
    %1590 = vmatprep.subr.mxu0 0.0
    %1591 = vmatpush1.msra.mxu0 0.0
    %1592 = vmatprep.subr.mxu0 0.0
    %1593 = vmatpush1.msra.mxu0 0.0
    %1594 = vmatprep.subr.mxu0 0.0
    %1595 = vmatpush1.msra.mxu0 0.0
    %1596 = vmatprep.subr.mxu0 0.0
    %1597 = vmatpush1.msra.mxu0 0.0
    %1598 = vmatprep.mubr.f32.mxu0 0.0
    %1599 = vmatmul.mubr.f32.gmra.mrb[0].mxu0 %v240
    %v1600 = vpop.f32.mrb[0].mxu0
    %v1601 = vadd.f32 0.0, %v1600
    %v1602 = vpop.f32.mrb[0].mxu0
    %1603 = vmatprep.mubr.f32.mxu0 0.0
    %1604 = vmatmul.mubr.f32.gmra.mrb[0].mxu0 %v243
    %v1605 = vpop.f32.mrb[0].mxu0
    %v1606 = vadd.f32 0.0, %v1605
    %v1607 = vpop.f32.mrb[0].mxu0
    %1608 = vmatprep.mubr.f32.mxu0 0.0
    %1609 = vmatmul.mubr.f32.gmra.mrb[0].mxu0 %v246
    %v1610 = vpop.f32.mrb[0].mxu0
    %v1611 = vadd.f32 0.0, %v1610
    %v1612 = vpop.f32.mrb[0].mxu0
    %1613 = vmatprep.mubr.f32.mxu0 0.0
    %1614 = vmatmul.mubr.f32.gmra.mrb[0].mxu0 %v249
    %v1615 = vpop.f32.mrb[0].mxu0
    %v1616 = vadd.f32 0.0, %v1615
    %v1617 = vpop.f32.mrb[0].mxu0
    %1618 = vdwg.mxu0
    %v1619 = vmax.f32 %v1601, 0.0
    %v1620 = vmax.f32 %v1606, 0.0
    %v1621 = vmax.f32 %v1611, 0.0
    %v1622 = vmax.f32 %v1616, 0.0
    %1623 = vmatprep.subr.mxu0 0.0
    %1624 = vmatpush1.msra.mxu0 %v1347
    %1625 = vmatprep.subr.mxu0 0.0
    %1626 = vmatpush1.msra.mxu0 %v1348
    %1627 = vmatprep.subr.mxu0 0.0
    %1628 = vmatpush1.msra.mxu0 %v1349
    %1629 = vmatprep.subr.mxu0 0.0
    %1630 = vmatpush1.msra.mxu0 %v1350
    %1631 = vmatprep.subr.mxu0 0.0
    %1632 = vmatpush1.msra.mxu0 %v1436
    %1633 = vmatprep.subr.mxu0 0.0
    %1634 = vmatpush1.msra.mxu0 %v1437
    %1635 = vmatprep.subr.mxu0 0.0
    %1636 = vmatpush1.msra.mxu0 %v1438
    %1637 = vmatprep.subr.mxu0 0.0
    %1638 = vmatpush1.msra.mxu0 %v1439
    %1639 = vmatprep.subr.mxu0 0.0
    %1640 = vmatpush1.msra.mxu0 1.0
    %1641 = vmatprep.subr.mxu0 0.0
    %1642 = vmatpush1.msra.mxu0 0.0
    %1643 = vmatprep.subr.mxu0 0.0
    %1644 = vmatpush1.msra.mxu0 0.0
    %1645 = vmatprep.subr.mxu0 0.0
    %1646 = vmatpush1.msra.mxu0 0.0
    %1647 = vmatprep.subr.mxu0 0.0
    %1648 = vmatpush1.msra.mxu0 0.0
    %1649 = vmatprep.subr.mxu0 0.0
    %1650 = vmatpush1.msra.mxu0 0.0
    %1651 = vmatprep.subr.mxu0 0.0
    %1652 = vmatpush1.msra.mxu0 0.0
    %1653 = vmatprep.subr.mxu0 0.0
    %1654 = vmatpush1.msra.mxu0 0.0
    %1655 = vmatprep.subr.mxu0 0.0
    %1656 = vmatpush1.msra.mxu0 0.0
    %1657 = vmatprep.subr.mxu0 0.0
    %1658 = vmatpush1.msra.mxu0 0.0
    %1659 = vmatprep.subr.mxu0 0.0
    %1660 = vmatpush1.msra.mxu0 0.0
    %1661 = vmatprep.subr.mxu0 0.0
    %1662 = vmatpush1.msra.mxu0 0.0
    %1663 = vmatprep.subr.mxu0 0.0
    %1664 = vmatpush1.msra.mxu0 0.0
    %1665 = vmatprep.subr.mxu0 0.0
    %1666 = vmatpush1.msra.mxu0 0.0
    %1667 = vmatprep.subr.mxu0 0.0
    %1668 = vmatpush1.msra.mxu0 0.0
    %1669 = vmatprep.subr.mxu0 0.0
    %1670 = vmatpush1.msra.mxu0 0.0
    %1671 = vmatprep.subr.mxu0 0.0
    %1672 = vmatpush1.msra.mxu0 0.0
    %1673 = vmatprep.subr.mxu0 0.0
    %1674 = vmatpush1.msra.mxu0 0.0
    %1675 = vmatprep.subr.mxu0 0.0
    %1676 = vmatpush1.msra.mxu0 0.0
    %1677 = vmatprep.subr.mxu0 0.0
    %1678 = vmatpush1.msra.mxu0 0.0
    %1679 = vmatprep.subr.mxu0 0.0
    %1680 = vmatpush1.msra.mxu0 0.0
    %1681 = vmatprep.subr.mxu0 0.0
    %1682 = vmatpush1.msra.mxu0 0.0
    %1683 = vmatprep.subr.mxu0 0.0
    %1684 = vmatpush1.msra.mxu0 0.0
    %1685 = vmatprep.subr.mxu0 0.0
    %1686 = vmatpush1.msra.mxu0 0.0
    %1687 = vmatprep.mubr.f32.mxu0 0.0
    %1688 = vmatmul.mubr.f32.gmra.mrb[0].mxu0 %v524
    %v1689 = vpop.f32.mrb[0].mxu0
    %v1690 = vadd.f32 0.0, %v1689
    %v1691 = vpop.f32.mrb[0].mxu0
    %1692 = vmatprep.mubr.f32.mxu0 0.0
    %1693 = vmatmul.mubr.f32.gmra.mrb[0].mxu0 %v527
    %v1694 = vpop.f32.mrb[0].mxu0
    %v1695 = vadd.f32 0.0, %v1694
    %v1696 = vpop.f32.mrb[0].mxu0
    %1697 = vmatprep.mubr.f32.mxu0 0.0
    %1698 = vmatmul.mubr.f32.gmra.mrb[0].mxu0 %v530
    %v1699 = vpop.f32.mrb[0].mxu0
    %v1700 = vadd.f32 0.0, %v1699
    %v1701 = vpop.f32.mrb[0].mxu0
    %1702 = vmatprep.mubr.f32.mxu0 0.0
    %1703 = vmatmul.mubr.f32.gmra.mrb[0].mxu0 %v533
    %v1704 = vpop.f32.mrb[0].mxu0
    %v1705 = vadd.f32 0.0, %v1704
    %v1706 = vpop.f32.mrb[0].mxu0
    %1707 = vdwg.mxu0
    %v1708 = vmax.f32 %v1690, 0.0
    %v1709 = vmax.f32 %v1695, 0.0
    %v1710 = vmax.f32 %v1700, 0.0
    %v1711 = vmax.f32 %v1705, 0.0
    %s1712 = scalar_lea.vmem [#allocation2], 224
    %v1713 = vld [vmem:[%s1712] sm:$0xff]
    %v1714 = vld [vmem:[%s1712 + $0x8] sm:$0xff]
    %v1715 = vld [vmem:[%s1712 + $0x10] sm:$0xff]
    %v1716 = vld [vmem:[%s1712 + $0x18] sm:$0xff]
    %1717 = vmatprep.subr.mxu0 0.0
    %1718 = vmatpush1.msra.mxu0 %v1713
    %1719 = vmatprep.subr.mxu0 0.0
    %1720 = vmatpush1.msra.mxu0 %v1714
    %1721 = vmatprep.subr.mxu0 0.0
    %1722 = vmatpush1.msra.mxu0 %v1715
    %1723 = vmatprep.subr.mxu0 0.0
    %1724 = vmatpush1.msra.mxu0 %v1716
    %1725 = vmatprep.subr.mxu0 0.0
    %1726 = vmatpush1.msra.mxu0 %v1530
    %1727 = vmatprep.subr.mxu0 0.0
    %1728 = vmatpush1.msra.mxu0 %v1531
    %1729 = vmatprep.subr.mxu0 0.0
    %1730 = vmatpush1.msra.mxu0 %v1532
    %1731 = vmatprep.subr.mxu0 0.0
    %1732 = vmatpush1.msra.mxu0 %v1533
    %1733 = vmatprep.subr.mxu0 0.0
    %1734 = vmatpush1.msra.mxu0 1.0
    %1735 = vmatprep.subr.mxu0 0.0
    %1736 = vmatpush1.msra.mxu0 0.0
    %1737 = vmatprep.subr.mxu0 0.0
    %1738 = vmatpush1.msra.mxu0 0.0
    %1739 = vmatprep.subr.mxu0 0.0
    %1740 = vmatpush1.msra.mxu0 0.0
    %1741 = vmatprep.subr.mxu0 0.0
    %1742 = vmatpush1.msra.mxu0 0.0
    %1743 = vmatprep.subr.mxu0 0.0
    %1744 = vmatpush1.msra.mxu0 0.0
    %1745 = vmatprep.subr.mxu0 0.0
    %1746 = vmatpush1.msra.mxu0 0.0
    %1747 = vmatprep.subr.mxu0 0.0
    %1748 = vmatpush1.msra.mxu0 0.0
    %1749 = vmatprep.subr.mxu0 0.0
    %1750 = vmatpush1.msra.mxu0 0.0
    %1751 = vmatprep.subr.mxu0 0.0
    %1752 = vmatpush1.msra.mxu0 0.0
    %1753 = vmatprep.subr.mxu0 0.0
    %1754 = vmatpush1.msra.mxu0 0.0
    %1755 = vmatprep.subr.mxu0 0.0
    %1756 = vmatpush1.msra.mxu0 0.0
    %1757 = vmatprep.subr.mxu0 0.0
    %1758 = vmatpush1.msra.mxu0 0.0
    %1759 = vmatprep.subr.mxu0 0.0
    %1760 = vmatpush1.msra.mxu0 0.0
    %1761 = vmatprep.subr.mxu0 0.0
    %1762 = vmatpush1.msra.mxu0 0.0
    %1763 = vmatprep.subr.mxu0 0.0
    %1764 = vmatpush1.msra.mxu0 0.0
    %1765 = vmatprep.subr.mxu0 0.0
    %1766 = vmatpush1.msra.mxu0 0.0
    %1767 = vmatprep.subr.mxu0 0.0
    %1768 = vmatpush1.msra.mxu0 0.0
    %1769 = vmatprep.subr.mxu0 0.0
    %1770 = vmatpush1.msra.mxu0 0.0
    %1771 = vmatprep.subr.mxu0 0.0
    %1772 = vmatpush1.msra.mxu0 0.0
    %1773 = vmatprep.subr.mxu0 0.0
    %1774 = vmatpush1.msra.mxu0 0.0
    %1775 = vmatprep.subr.mxu0 0.0
    %1776 = vmatpush1.msra.mxu0 0.0
    %1777 = vmatprep.subr.mxu0 0.0
    %1778 = vmatpush1.msra.mxu0 0.0
    %1779 = vmatprep.subr.mxu0 0.0
    %1780 = vmatpush1.msra.mxu0 0.0
    %1781 = vmatprep.mubr.f32.mxu0 0.0
    %1782 = vmatmul.mubr.f32.gmra.mrb[0].mxu0 %v45
    %v1783 = vpop.f32.mrb[0].mxu0
    %v1784 = vadd.f32 0.0, %v1783
    %v1785 = vpop.f32.mrb[0].mxu0
    %1786 = vmatprep.mubr.f32.mxu0 0.0
    %1787 = vmatmul.mubr.f32.gmra.mrb[0].mxu0 %v48
    %v1788 = vpop.f32.mrb[0].mxu0
    %v1789 = vadd.f32 0.0, %v1788
    %v1790 = vpop.f32.mrb[0].mxu0
    %1791 = vmatprep.mubr.f32.mxu0 0.0
    %1792 = vmatmul.mubr.f32.gmra.mrb[0].mxu0 %v51
    %v1793 = vpop.f32.mrb[0].mxu0
    %v1794 = vadd.f32 0.0, %v1793
    %v1795 = vpop.f32.mrb[0].mxu0
    %1796 = vmatprep.mubr.f32.mxu0 0.0
    %1797 = vmatmul.mubr.f32.gmra.mrb[0].mxu0 %v54
    %v1798 = vpop.f32.mrb[0].mxu0
    %v1799 = vadd.f32 0.0, %v1798
    %v1800 = vpop.f32.mrb[0].mxu0
    %1801 = vdwg.mxu0
    %v1802 = vmax.f32 %v1784, 0.0
    %v1803 = vmax.f32 %v1789, 0.0
    %v1804 = vmax.f32 %v1794, 0.0
    %v1805 = vmax.f32 %v1799, 0.0
    %1806 = vmatprep.subr.mxu0 0.0
    %1807 = vmatpush1.msra.mxu0 %v1530
    %1808 = vmatprep.subr.mxu0 0.0
    %1809 = vmatpush1.msra.mxu0 %v1531
    %1810 = vmatprep.subr.mxu0 0.0
    %1811 = vmatpush1.msra.mxu0 %v1532
    %1812 = vmatprep.subr.mxu0 0.0
    %1813 = vmatpush1.msra.mxu0 %v1533
    %1814 = vmatprep.subr.mxu0 0.0
    %1815 = vmatpush1.msra.mxu0 %v1619
    %1816 = vmatprep.subr.mxu0 0.0
    %1817 = vmatpush1.msra.mxu0 %v1620
    %1818 = vmatprep.subr.mxu0 0.0
    %1819 = vmatpush1.msra.mxu0 %v1621
    %1820 = vmatprep.subr.mxu0 0.0
    %1821 = vmatpush1.msra.mxu0 %v1622
    %1822 = vmatprep.subr.mxu0 0.0
    %1823 = vmatpush1.msra.mxu0 1.0
    %1824 = vmatprep.subr.mxu0 0.0
    %1825 = vmatpush1.msra.mxu0 0.0
    %1826 = vmatprep.subr.mxu0 0.0
    %1827 = vmatpush1.msra.mxu0 0.0
    %1828 = vmatprep.subr.mxu0 0.0
    %1829 = vmatpush1.msra.mxu0 0.0
    %1830 = vmatprep.subr.mxu0 0.0
    %1831 = vmatpush1.msra.mxu0 0.0
    %1832 = vmatprep.subr.mxu0 0.0
    %1833 = vmatpush1.msra.mxu0 0.0
    %1834 = vmatprep.subr.mxu0 0.0
    %1835 = vmatpush1.msra.mxu0 0.0
    %1836 = vmatprep.subr.mxu0 0.0
    %1837 = vmatpush1.msra.mxu0 0.0
    %1838 = vmatprep.subr.mxu0 0.0
    %1839 = vmatpush1.msra.mxu0 0.0
    %1840 = vmatprep.subr.mxu0 0.0
    %1841 = vmatpush1.msra.mxu0 0.0
    %1842 = vmatprep.subr.mxu0 0.0
    %1843 = vmatpush1.msra.mxu0 0.0
    %1844 = vmatprep.subr.mxu0 0.0
    %1845 = vmatpush1.msra.mxu0 0.0
    %1846 = vmatprep.subr.mxu0 0.0
    %1847 = vmatpush1.msra.mxu0 0.0
    %1848 = vmatprep.subr.mxu0 0.0
    %1849 = vmatpush1.msra.mxu0 0.0
    %1850 = vmatprep.subr.mxu0 0.0
    %1851 = vmatpush1.msra.mxu0 0.0
    %1852 = vmatprep.subr.mxu0 0.0
    %1853 = vmatpush1.msra.mxu0 0.0
    %1854 = vmatprep.subr.mxu0 0.0
    %1855 = vmatpush1.msra.mxu0 0.0
    %1856 = vmatprep.subr.mxu0 0.0
    %1857 = vmatpush1.msra.mxu0 0.0
    %1858 = vmatprep.subr.mxu0 0.0
    %1859 = vmatpush1.msra.mxu0 0.0
    %1860 = vmatprep.subr.mxu0 0.0
    %1861 = vmatpush1.msra.mxu0 0.0
    %1862 = vmatprep.subr.mxu0 0.0
    %1863 = vmatpush1.msra.mxu0 0.0
    %1864 = vmatprep.subr.mxu0 0.0
    %1865 = vmatpush1.msra.mxu0 0.0
    %1866 = vmatprep.subr.mxu0 0.0
    %1867 = vmatpush1.msra.mxu0 0.0
    %1868 = vmatprep.subr.mxu0 0.0
    %1869 = vmatpush1.msra.mxu0 0.0
    %1870 = vmatprep.mubr.f32.mxu0 0.0
    %1871 = vmatmul.mubr.f32.gmra.mrb[0].mxu0 %v240
    %v1872 = vpop.f32.mrb[0].mxu0
    %v1873 = vadd.f32 0.0, %v1872
    %v1874 = vpop.f32.mrb[0].mxu0
    %1875 = vmatprep.mubr.f32.mxu0 0.0
    %1876 = vmatmul.mubr.f32.gmra.mrb[0].mxu0 %v243
    %v1877 = vpop.f32.mrb[0].mxu0
    %v1878 = vadd.f32 0.0, %v1877
    %v1879 = vpop.f32.mrb[0].mxu0
    %1880 = vmatprep.mubr.f32.mxu0 0.0
    %1881 = vmatmul.mubr.f32.gmra.mrb[0].mxu0 %v246
    %v1882 = vpop.f32.mrb[0].mxu0
    %v1883 = vadd.f32 0.0, %v1882
    %v1884 = vpop.f32.mrb[0].mxu0
    %1885 = vmatprep.mubr.f32.mxu0 0.0
    %1886 = vmatmul.mubr.f32.gmra.mrb[0].mxu0 %v249
    %v1887 = vpop.f32.mrb[0].mxu0
    %v1888 = vadd.f32 0.0, %v1887
    %v1889 = vpop.f32.mrb[0].mxu0
    %1890 = vdwg.mxu0
    %v1891 = vmax.f32 %v1873, 0.0
    %v1892 = vmax.f32 %v1878, 0.0
    %v1893 = vmax.f32 %v1883, 0.0
    %v1894 = vmax.f32 %v1888, 0.0
    %1895 = vmatprep.subr.mxu0 0.0
    %1896 = vmatpush1.msra.mxu0 %v1619
    %1897 = vmatprep.subr.mxu0 0.0
    %1898 = vmatpush1.msra.mxu0 %v1620
    %1899 = vmatprep.subr.mxu0 0.0
    %1900 = vmatpush1.msra.mxu0 %v1621
    %1901 = vmatprep.subr.mxu0 0.0
    %1902 = vmatpush1.msra.mxu0 %v1622
    %1903 = vmatprep.subr.mxu0 0.0
    %1904 = vmatpush1.msra.mxu0 %v1708
    %1905 = vmatprep.subr.mxu0 0.0
    %1906 = vmatpush1.msra.mxu0 %v1709
    %1907 = vmatprep.subr.mxu0 0.0
    %1908 = vmatpush1.msra.mxu0 %v1710
    %1909 = vmatprep.subr.mxu0 0.0
    %1910 = vmatpush1.msra.mxu0 %v1711
    %1911 = vmatprep.subr.mxu0 0.0
    %1912 = vmatpush1.msra.mxu0 1.0
    %1913 = vmatprep.subr.mxu0 0.0
    %1914 = vmatpush1.msra.mxu0 0.0
    %1915 = vmatprep.subr.mxu0 0.0
    %1916 = vmatpush1.msra.mxu0 0.0
    %1917 = vmatprep.subr.mxu0 0.0
    %1918 = vmatpush1.msra.mxu0 0.0
    %1919 = vmatprep.subr.mxu0 0.0
    %1920 = vmatpush1.msra.mxu0 0.0
    %1921 = vmatprep.subr.mxu0 0.0
    %1922 = vmatpush1.msra.mxu0 0.0
    %1923 = vmatprep.subr.mxu0 0.0
    %1924 = vmatpush1.msra.mxu0 0.0
    %1925 = vmatprep.subr.mxu0 0.0
    %1926 = vmatpush1.msra.mxu0 0.0
    %1927 = vmatprep.subr.mxu0 0.0
    %1928 = vmatpush1.msra.mxu0 0.0
    %1929 = vmatprep.subr.mxu0 0.0
    %1930 = vmatpush1.msra.mxu0 0.0
    %1931 = vmatprep.subr.mxu0 0.0
    %1932 = vmatpush1.msra.mxu0 0.0
    %1933 = vmatprep.subr.mxu0 0.0
    %1934 = vmatpush1.msra.mxu0 0.0
    %1935 = vmatprep.subr.mxu0 0.0
    %1936 = vmatpush1.msra.mxu0 0.0
    %1937 = vmatprep.subr.mxu0 0.0
    %1938 = vmatpush1.msra.mxu0 0.0
    %1939 = vmatprep.subr.mxu0 0.0
    %1940 = vmatpush1.msra.mxu0 0.0
    %1941 = vmatprep.subr.mxu0 0.0
    %1942 = vmatpush1.msra.mxu0 0.0
    %1943 = vmatprep.subr.mxu0 0.0
    %1944 = vmatpush1.msra.mxu0 0.0
    %1945 = vmatprep.subr.mxu0 0.0
    %1946 = vmatpush1.msra.mxu0 0.0
    %1947 = vmatprep.subr.mxu0 0.0
    %1948 = vmatpush1.msra.mxu0 0.0
    %1949 = vmatprep.subr.mxu0 0.0
    %1950 = vmatpush1.msra.mxu0 0.0
    %1951 = vmatprep.subr.mxu0 0.0
    %1952 = vmatpush1.msra.mxu0 0.0
    %1953 = vmatprep.subr.mxu0 0.0
    %1954 = vmatpush1.msra.mxu0 0.0
    %1955 = vmatprep.subr.mxu0 0.0
    %1956 = vmatpush1.msra.mxu0 0.0
    %1957 = vmatprep.subr.mxu0 0.0
    %1958 = vmatpush1.msra.mxu0 0.0
    %1959 = vmatprep.mubr.f32.mxu0 0.0
    %1960 = vmatmul.mubr.f32.gmra.mrb[0].mxu0 %v524
    %v1961 = vpop.f32.mrb[0].mxu0
    %v1962 = vadd.f32 0.0, %v1961
    %v1963 = vpop.f32.mrb[0].mxu0
    %1964 = vmatprep.mubr.f32.mxu0 0.0
    %1965 = vmatmul.mubr.f32.gmra.mrb[0].mxu0 %v527
    %v1966 = vpop.f32.mrb[0].mxu0
    %v1967 = vadd.f32 0.0, %v1966
    %v1968 = vpop.f32.mrb[0].mxu0
    %1969 = vmatprep.mubr.f32.mxu0 0.0
    %1970 = vmatmul.mubr.f32.gmra.mrb[0].mxu0 %v530
    %v1971 = vpop.f32.mrb[0].mxu0
    %v1972 = vadd.f32 0.0, %v1971
    %v1973 = vpop.f32.mrb[0].mxu0
    %1974 = vmatprep.mubr.f32.mxu0 0.0
    %1975 = vmatmul.mubr.f32.gmra.mrb[0].mxu0 %v533
    %v1976 = vpop.f32.mrb[0].mxu0
    %v1977 = vadd.f32 0.0, %v1976
    %v1978 = vpop.f32.mrb[0].mxu0
    %1979 = vdwg.mxu0
    %v1980 = vmax.f32 %v1962, 0.0
    %v1981 = vmax.f32 %v1967, 0.0
    %v1982 = vmax.f32 %v1972, 0.0
    %v1983 = vmax.f32 %v1977, 0.0
    %1984 = vmatprep.subr.mxu0 0.0
    %1985 = vmatpush1.msra.mxu0 %v1802
    %1986 = vmatprep.subr.mxu0 0.0
    %1987 = vmatpush1.msra.mxu0 %v1803
    %1988 = vmatprep.subr.mxu0 0.0
    %1989 = vmatpush1.msra.mxu0 %v1804
    %1990 = vmatprep.subr.mxu0 0.0
    %1991 = vmatpush1.msra.mxu0 %v1805
    %1992 = vmatprep.subr.mxu0 0.0
    %1993 = vmatpush1.msra.mxu0 %v1891
    %1994 = vmatprep.subr.mxu0 0.0
    %1995 = vmatpush1.msra.mxu0 %v1892
    %1996 = vmatprep.subr.mxu0 0.0
    %1997 = vmatpush1.msra.mxu0 %v1893
    %1998 = vmatprep.subr.mxu0 0.0
    %1999 = vmatpush1.msra.mxu0 %v1894
    %2000 = vmatprep.subr.mxu0 0.0
    %2001 = vmatpush1.msra.mxu0 1.0
    %2002 = vmatprep.subr.mxu0 0.0
    %2003 = vmatpush1.msra.mxu0 0.0
    %2004 = vmatprep.subr.mxu0 0.0
    %2005 = vmatpush1.msra.mxu0 0.0
    %2006 = vmatprep.subr.mxu0 0.0
    %2007 = vmatpush1.msra.mxu0 0.0
    %2008 = vmatprep.subr.mxu0 0.0
    %2009 = vmatpush1.msra.mxu0 0.0
    %2010 = vmatprep.subr.mxu0 0.0
    %2011 = vmatpush1.msra.mxu0 0.0
    %2012 = vmatprep.subr.mxu0 0.0
    %2013 = vmatpush1.msra.mxu0 0.0
    %2014 = vmatprep.subr.mxu0 0.0
    %2015 = vmatpush1.msra.mxu0 0.0
    %2016 = vmatprep.subr.mxu0 0.0
    %2017 = vmatpush1.msra.mxu0 0.0
    %2018 = vmatprep.subr.mxu0 0.0
    %2019 = vmatpush1.msra.mxu0 0.0
    %2020 = vmatprep.subr.mxu0 0.0
    %2021 = vmatpush1.msra.mxu0 0.0
    %2022 = vmatprep.subr.mxu0 0.0
    %2023 = vmatpush1.msra.mxu0 0.0
    %2024 = vmatprep.subr.mxu0 0.0
    %2025 = vmatpush1.msra.mxu0 0.0
    %2026 = vmatprep.subr.mxu0 0.0
    %2027 = vmatpush1.msra.mxu0 0.0
    %2028 = vmatprep.subr.mxu0 0.0
    %2029 = vmatpush1.msra.mxu0 0.0
    %2030 = vmatprep.subr.mxu0 0.0
    %2031 = vmatpush1.msra.mxu0 0.0
    %2032 = vmatprep.subr.mxu0 0.0
    %2033 = vmatpush1.msra.mxu0 0.0
    %2034 = vmatprep.subr.mxu0 0.0
    %2035 = vmatpush1.msra.mxu0 0.0
    %2036 = vmatprep.subr.mxu0 0.0
    %2037 = vmatpush1.msra.mxu0 0.0
    %2038 = vmatprep.subr.mxu0 0.0
    %2039 = vmatpush1.msra.mxu0 0.0
    %2040 = vmatprep.subr.mxu0 0.0
    %2041 = vmatpush1.msra.mxu0 0.0
    %2042 = vmatprep.subr.mxu0 0.0
    %2043 = vmatpush1.msra.mxu0 0.0
    %2044 = vmatprep.subr.mxu0 0.0
    %2045 = vmatpush1.msra.mxu0 0.0
    %2046 = vmatprep.subr.mxu0 0.0
    %2047 = vmatpush1.msra.mxu0 0.0
    %2048 = vmatprep.mubr.f32.mxu0 0.0
    %2049 = vmatmul.mubr.f32.gmra.mrb[0].mxu0 %v240
    %v2050 = vpop.f32.mrb[0].mxu0
    %v2051 = vadd.f32 0.0, %v2050
    %v2052 = vpop.f32.mrb[0].mxu0
    %2053 = vmatprep.mubr.f32.mxu0 0.0
    %2054 = vmatmul.mubr.f32.gmra.mrb[0].mxu0 %v243
    %v2055 = vpop.f32.mrb[0].mxu0
    %v2056 = vadd.f32 0.0, %v2055
    %v2057 = vpop.f32.mrb[0].mxu0
    %2058 = vmatprep.mubr.f32.mxu0 0.0
    %2059 = vmatmul.mubr.f32.gmra.mrb[0].mxu0 %v246
    %v2060 = vpop.f32.mrb[0].mxu0
    %v2061 = vadd.f32 0.0, %v2060
    %v2062 = vpop.f32.mrb[0].mxu0
    %2063 = vmatprep.mubr.f32.mxu0 0.0
    %2064 = vmatmul.mubr.f32.gmra.mrb[0].mxu0 %v249
    %v2065 = vpop.f32.mrb[0].mxu0
    %v2066 = vadd.f32 0.0, %v2065
    %v2067 = vpop.f32.mrb[0].mxu0
    %2068 = vdwg.mxu0
    %v2069 = vmax.f32 %v2051, 0.0
    %v2070 = vmax.f32 %v2056, 0.0
    %v2071 = vmax.f32 %v2061, 0.0
    %v2072 = vmax.f32 %v2066, 0.0
    %2073 = vmatprep.subr.mxu0 0.0
    %2074 = vmatpush1.msra.mxu0 %v1891
    %2075 = vmatprep.subr.mxu0 0.0
    %2076 = vmatpush1.msra.mxu0 %v1892
    %2077 = vmatprep.subr.mxu0 0.0
    %2078 = vmatpush1.msra.mxu0 %v1893
    %2079 = vmatprep.subr.mxu0 0.0
    %2080 = vmatpush1.msra.mxu0 %v1894
    %2081 = vmatprep.subr.mxu0 0.0
    %2082 = vmatpush1.msra.mxu0 %v1980
    %2083 = vmatprep.subr.mxu0 0.0
    %2084 = vmatpush1.msra.mxu0 %v1981
    %2085 = vmatprep.subr.mxu0 0.0
    %2086 = vmatpush1.msra.mxu0 %v1982
    %2087 = vmatprep.subr.mxu0 0.0
    %2088 = vmatpush1.msra.mxu0 %v1983
    %2089 = vmatprep.subr.mxu0 0.0
    %2090 = vmatpush1.msra.mxu0 1.0
    %2091 = vmatprep.subr.mxu0 0.0
    %2092 = vmatpush1.msra.mxu0 0.0
    %2093 = vmatprep.subr.mxu0 0.0
    %2094 = vmatpush1.msra.mxu0 0.0
    %2095 = vmatprep.subr.mxu0 0.0
    %2096 = vmatpush1.msra.mxu0 0.0
    %2097 = vmatprep.subr.mxu0 0.0
    %2098 = vmatpush1.msra.mxu0 0.0
    %2099 = vmatprep.subr.mxu0 0.0
    %2100 = vmatpush1.msra.mxu0 0.0
    %2101 = vmatprep.subr.mxu0 0.0
    %2102 = vmatpush1.msra.mxu0 0.0
    %2103 = vmatprep.subr.mxu0 0.0
    %2104 = vmatpush1.msra.mxu0 0.0
    %2105 = vmatprep.subr.mxu0 0.0
    %2106 = vmatpush1.msra.mxu0 0.0
    %2107 = vmatprep.subr.mxu0 0.0
    %2108 = vmatpush1.msra.mxu0 0.0
    %2109 = vmatprep.subr.mxu0 0.0
    %2110 = vmatpush1.msra.mxu0 0.0
    %2111 = vmatprep.subr.mxu0 0.0
    %2112 = vmatpush1.msra.mxu0 0.0
    %2113 = vmatprep.subr.mxu0 0.0
    %2114 = vmatpush1.msra.mxu0 0.0
    %2115 = vmatprep.subr.mxu0 0.0
    %2116 = vmatpush1.msra.mxu0 0.0
    %2117 = vmatprep.subr.mxu0 0.0
    %2118 = vmatpush1.msra.mxu0 0.0
    %2119 = vmatprep.subr.mxu0 0.0
    %2120 = vmatpush1.msra.mxu0 0.0
    %2121 = vmatprep.subr.mxu0 0.0
    %2122 = vmatpush1.msra.mxu0 0.0
    %2123 = vmatprep.subr.mxu0 0.0
    %2124 = vmatpush1.msra.mxu0 0.0
    %2125 = vmatprep.subr.mxu0 0.0
    %2126 = vmatpush1.msra.mxu0 0.0
    %2127 = vmatprep.subr.mxu0 0.0
    %2128 = vmatpush1.msra.mxu0 0.0
    %2129 = vmatprep.subr.mxu0 0.0
    %2130 = vmatpush1.msra.mxu0 0.0
    %2131 = vmatprep.subr.mxu0 0.0
    %2132 = vmatpush1.msra.mxu0 0.0
    %2133 = vmatprep.subr.mxu0 0.0
    %2134 = vmatpush1.msra.mxu0 0.0
    %2135 = vmatprep.subr.mxu0 0.0
    %2136 = vmatpush1.msra.mxu0 0.0
    %2137 = vmatprep.mubr.f32.mxu0 0.0
    %2138 = vmatmul.mubr.f32.gmra.mrb[0].mxu0 %v524
    %v2139 = vpop.f32.mrb[0].mxu0
    %v2140 = vadd.f32 0.0, %v2139
    %v2141 = vpop.f32.mrb[0].mxu0
    %2142 = vmatprep.mubr.f32.mxu0 0.0
    %2143 = vmatmul.mubr.f32.gmra.mrb[0].mxu0 %v527
    %v2144 = vpop.f32.mrb[0].mxu0
    %v2145 = vadd.f32 0.0, %v2144
    %v2146 = vpop.f32.mrb[0].mxu0
    %2147 = vmatprep.mubr.f32.mxu0 0.0
    %2148 = vmatmul.mubr.f32.gmra.mrb[0].mxu0 %v530
    %v2149 = vpop.f32.mrb[0].mxu0
    %v2150 = vadd.f32 0.0, %v2149
    %v2151 = vpop.f32.mrb[0].mxu0
    %2152 = vmatprep.mubr.f32.mxu0 0.0
    %2153 = vmatmul.mubr.f32.gmra.mrb[0].mxu0 %v533
    %v2154 = vpop.f32.mrb[0].mxu0
    %v2155 = vadd.f32 0.0, %v2154
    %v2156 = vpop.f32.mrb[0].mxu0
    %2157 = vdwg.mxu0
    %v2158 = vmax.f32 %v2140, 0.0
    %v2159 = vmax.f32 %v2145, 0.0
    %v2160 = vmax.f32 %v2150, 0.0
    %v2161 = vmax.f32 %v2155, 0.0
    %2162 = vmatprep.subr.mxu0 0.0
    %2163 = vmatpush1.msra.mxu0 %v2069
    %2164 = vmatprep.subr.mxu0 0.0
    %2165 = vmatpush1.msra.mxu0 %v2070
    %2166 = vmatprep.subr.mxu0 0.0
    %2167 = vmatpush1.msra.mxu0 %v2071
    %2168 = vmatprep.subr.mxu0 0.0
    %2169 = vmatpush1.msra.mxu0 %v2072
    %2170 = vmatprep.subr.mxu0 0.0
    %2171 = vmatpush1.msra.mxu0 %v2158
    %2172 = vmatprep.subr.mxu0 0.0
    %2173 = vmatpush1.msra.mxu0 %v2159
    %2174 = vmatprep.subr.mxu0 0.0
    %2175 = vmatpush1.msra.mxu0 %v2160
    %2176 = vmatprep.subr.mxu0 0.0
    %2177 = vmatpush1.msra.mxu0 %v2161
    %2178 = vmatprep.subr.mxu0 0.0
    %2179 = vmatpush1.msra.mxu0 1.0
    %2180 = vmatprep.subr.mxu0 0.0
    %2181 = vmatpush1.msra.mxu0 0.0
    %2182 = vmatprep.subr.mxu0 0.0
    %2183 = vmatpush1.msra.mxu0 0.0
    %2184 = vmatprep.subr.mxu0 0.0
    %2185 = vmatpush1.msra.mxu0 0.0
    %2186 = vmatprep.subr.mxu0 0.0
    %2187 = vmatpush1.msra.mxu0 0.0
    %2188 = vmatprep.subr.mxu0 0.0
    %2189 = vmatpush1.msra.mxu0 0.0
    %2190 = vmatprep.subr.mxu0 0.0
    %2191 = vmatpush1.msra.mxu0 0.0
    %2192 = vmatprep.subr.mxu0 0.0
    %2193 = vmatpush1.msra.mxu0 0.0
    %2194 = vmatprep.subr.mxu0 0.0
    %2195 = vmatpush1.msra.mxu0 0.0
    %2196 = vmatprep.subr.mxu0 0.0
    %2197 = vmatpush1.msra.mxu0 0.0
    %2198 = vmatprep.subr.mxu0 0.0
    %2199 = vmatpush1.msra.mxu0 0.0
    %2200 = vmatprep.subr.mxu0 0.0
    %2201 = vmatpush1.msra.mxu0 0.0
    %2202 = vmatprep.subr.mxu0 0.0
    %2203 = vmatpush1.msra.mxu0 0.0
    %2204 = vmatprep.subr.mxu0 0.0
    %2205 = vmatpush1.msra.mxu0 0.0
    %2206 = vmatprep.subr.mxu0 0.0
    %2207 = vmatpush1.msra.mxu0 0.0
    %2208 = vmatprep.subr.mxu0 0.0
    %2209 = vmatpush1.msra.mxu0 0.0
    %2210 = vmatprep.subr.mxu0 0.0
    %2211 = vmatpush1.msra.mxu0 0.0
    %2212 = vmatprep.subr.mxu0 0.0
    %2213 = vmatpush1.msra.mxu0 0.0
    %2214 = vmatprep.subr.mxu0 0.0
    %2215 = vmatpush1.msra.mxu0 0.0
    %2216 = vmatprep.subr.mxu0 0.0
    %2217 = vmatpush1.msra.mxu0 0.0
    %2218 = vmatprep.subr.mxu0 0.0
    %2219 = vmatpush1.msra.mxu0 0.0
    %2220 = vmatprep.subr.mxu0 0.0
    %2221 = vmatpush1.msra.mxu0 0.0
    %2222 = vmatprep.subr.mxu0 0.0
    %2223 = vmatpush1.msra.mxu0 0.0
    %2224 = vmatprep.subr.mxu0 0.0
    %2225 = vmatpush1.msra.mxu0 0.0
    %2226 = vmatprep.mubr.f32.mxu0 0.0
    %2227 = vmatmul.mubr.f32.gmra.mrb[0].mxu0 %v524
    %v2228 = vpop.f32.mrb[0].mxu0
    %v2229 = vadd.f32 0.0, %v2228
    %v2230 = vpop.f32.mrb[0].mxu0
    %2231 = vmatprep.mubr.f32.mxu0 0.0
    %2232 = vmatmul.mubr.f32.gmra.mrb[0].mxu0 %v527
    %v2233 = vpop.f32.mrb[0].mxu0
    %v2234 = vadd.f32 0.0, %v2233
    %v2235 = vpop.f32.mrb[0].mxu0
    %2236 = vmatprep.mubr.f32.mxu0 0.0
    %2237 = vmatmul.mubr.f32.gmra.mrb[0].mxu0 %v530
    %v2238 = vpop.f32.mrb[0].mxu0
    %v2239 = vadd.f32 0.0, %v2238
    %v2240 = vpop.f32.mrb[0].mxu0
    %2241 = vmatprep.mubr.f32.mxu0 0.0
    %2242 = vmatmul.mubr.f32.gmra.mrb[0].mxu0 %v533
    %v2243 = vpop.f32.mrb[0].mxu0
    %v2244 = vadd.f32 0.0, %v2243
    %v2245 = vpop.f32.mrb[0].mxu0
    %2246 = vdwg.mxu0
    %v2247 = vmax.f32 %v2229, 0.0
    %v2248 = vmax.f32 %v2234, 0.0
    %v2249 = vmax.f32 %v2239, 0.0
    %v2250 = vmax.f32 %v2244, 0.0
    %vm2251 = vcmask 326656
    %v2253 = vsel %vm2251, %v38, 0
    %2255 = vmatprep.subr.mxu0 0.0
    %2256 = vmatpush1.msra.mxu0 %v2247
    %2257 = vmatprep.subr.mxu0 0.0
    %2258 = vmatpush1.msra.mxu0 %v2248
    %2259 = vmatprep.subr.mxu0 0.0
    %2260 = vmatpush1.msra.mxu0 %v2249
    %2261 = vmatprep.subr.mxu0 0.0
    %2262 = vmatpush1.msra.mxu0 %v2250
    %2263 = vmatprep.subr.mxu0 0.0
    %2264 = vmatpush1.msra.mxu0 1.0
    %2265 = vmatprep.subr.mxu0 0.0
    %2266 = vmatpush1.msra.mxu0 0.0
    %2267 = vmatprep.subr.mxu0 0.0
    %2268 = vmatpush1.msra.mxu0 0.0
    %2269 = vmatprep.subr.mxu0 0.0
    %2270 = vmatpush1.msra.mxu0 0.0
    %2271 = vmatprep.subr.mxu0 0.0
    %2272 = vmatpush1.msra.mxu0 0.0
    %2273 = vmatprep.subr.mxu0 0.0
    %2274 = vmatpush1.msra.mxu0 0.0
    %2275 = vmatprep.subr.mxu0 0.0
    %2276 = vmatpush1.msra.mxu0 0.0
    %2277 = vmatprep.subr.mxu0 0.0
    %2278 = vmatpush1.msra.mxu0 0.0
    %2279 = vmatprep.subr.mxu0 0.0
    %2280 = vmatpush1.msra.mxu0 0.0
    %2281 = vmatprep.subr.mxu0 0.0
    %2282 = vmatpush1.msra.mxu0 0.0
    %2283 = vmatprep.subr.mxu0 0.0
    %2284 = vmatpush1.msra.mxu0 0.0
    %2285 = vmatprep.subr.mxu0 0.0
    %2286 = vmatpush1.msra.mxu0 0.0
    %2287 = vmatprep.subr.mxu0 0.0
    %2288 = vmatpush1.msra.mxu0 0.0
    %2289 = vmatprep.subr.mxu0 0.0
    %2290 = vmatpush1.msra.mxu0 0.0
    %2291 = vmatprep.subr.mxu0 0.0
    %2292 = vmatpush1.msra.mxu0 0.0
    %2293 = vmatprep.subr.mxu0 0.0
    %2294 = vmatpush1.msra.mxu0 0.0
    %2295 = vmatprep.subr.mxu0 0.0
    %2296 = vmatpush1.msra.mxu0 0.0
    %2297 = vmatprep.subr.mxu0 0.0
    %2298 = vmatpush1.msra.mxu0 0.0
    %2299 = vmatprep.subr.mxu0 0.0
    %2300 = vmatpush1.msra.mxu0 0.0
    %2301 = vmatprep.subr.mxu0 0.0
    %2302 = vmatpush1.msra.mxu0 0.0
    %2303 = vmatprep.subr.mxu0 0.0
    %2304 = vmatpush1.msra.mxu0 0.0
    %2305 = vmatprep.subr.mxu0 0.0
    %2306 = vmatpush1.msra.mxu0 0.0
    %2307 = vmatprep.subr.mxu0 0.0
    %2308 = vmatpush1.msra.mxu0 0.0
    %2309 = vmatprep.subr.mxu0 0.0
    %2310 = vmatpush1.msra.mxu0 0.0
    %2311 = vmatprep.subr.mxu0 0.0
    %2312 = vmatpush1.msra.mxu0 0.0
    %2313 = vmatprep.subr.mxu0 0.0
    %2314 = vmatpush1.msra.mxu0 0.0
    %2315 = vmatprep.subr.mxu0 0.0
    %2316 = vmatpush1.msra.mxu0 0.0
    %2317 = vmatprep.subr.mxu0 0.0
    %2318 = vmatpush1.msra.mxu0 0.0
    %2319 = vmatprep.mubr.f32.mxu0 0.0
    %2320 = vmatmul.mubr.f32.gmra.mrb[0].mxu0 %v2253
    %v2321 = vpop.f32.mrb[0].mxu0
    %v2322 = vadd.f32 0.0, %v2321
    %v2323 = vpop.f32.mrb[0].mxu0
    %2324 = vdwg.mxu0
    %2325 = vst [vmem:[#allocation5] sm:$0xff] %v2322
    // Predicated region
    $region14: #{tpu_custom_call.1} parent=1 // pred_check
      _
    $region15: #{tpu_custom_call.1} parent=1 // pred_check_branch
      %2327 = sbr.rel (0) target = $region17
    $region16: #{tpu_custom_call.1} parent=1 // pred_region
      %s2329 = ssub.s32 128, 128
      %2330 = vsyncadd [#allocation4], %s2329
      %s2332 = sshll.u32 [#allocation5], 4
      %s2333 = int_to_ptr.vmem [resolvable:$true] %s2332
      %2335 = dma.vmem_to_hbm [thread:$0]  %s2333, 128, %s2, [#allocation4]
    $region17: #{tpu_custom_call.1} parent=1 // pred_fallthru
      _
    // Predicated region
    $region18: #{tpu_custom_call.1} parent=1 // pred_check
      _
    $region19: #{tpu_custom_call.1} parent=1 // pred_check_branch
      %2337 = sbr.rel (0) target = $region21
    $region20: #{tpu_custom_call.1} parent=1 // pred_region
      %2338 = dma.done [#allocation4], 128
    $region21: #{tpu_custom_call.1} parent=1 // pred_fallthru
      _
    %2339 = vsyncpa [#allocation3], 1
    %2340 = vsyncpa [#allocation4], 1

</llo_original>
